<compile_context>
chip_gen: v6e
topology: v6e:2x2x1
jax: 0.10.0
libtpu: 0.0.40
codegen_flags: <defaults>
</compile_context>

<pallas_src>
import jax
import jax.numpy as jnp
from jax.experimental import pallas as pl
from jax.experimental.pallas import tpu as pltpu


def _gru_kernel(T, Bp, Hp):
    """Single-invocation GRU over T steps; everything (8,128)-tile aligned.

    x_ref   : (T*Bp, I)   time-major rows; step t occupies rows [t*Bp, (t+1)*Bp)
    h0_ref  : (Bp, Hp)    initial hidden, padded rows/lanes zero
    wih_ref : (I, 3*Hp)   [W_ir^T | W_in^T | W_iz^T], each gate 128-lane aligned
    whh_ref : (Hp, 3*Hp)  [W_hr^T | W_hn^T | W_hz^T], padded rows/cols zero
    bi_ref  : (1, 3*Hp)   [b_ir+b_hr | b_in | b_iz+b_hz]
    bhn_ref : (1, Hp)     b_hn (must stay inside the r*(...) term)
    out_ref : (Bp, T*Hp)  step t's hidden state at lanes [t*Hp, (t+1)*Hp)
    """

    def kernel(x_ref, h0_ref, wih_ref, whh_ref, bi_ref, bhn_ref, out_ref):
        # ---- prologue: input-side matmul for ALL timesteps (off the recurrence) ----
        gi = jnp.dot(x_ref[...], wih_ref[...],
                     preferred_element_type=jnp.float32) + bi_ref[...]   # (T*Bp, 3*Hp)

        h = h0_ref[...]                                                  # (Bp, Hp)
        whh = whh_ref[...]                                               # (Hp, 3*Hp)
        bhn = jnp.broadcast_to(bhn_ref[...], (Bp, Hp))                   # hoisted broadcast

        # ---- recurrence: one MXU push + gate EUP/VPU math per step ----
        # T is static -> Python unroll; every slice / store is a static,
        # whole-(8,128)-tile access (no masks, no sublane rotations).
        for t in range(T):
            gi_t = gi[t * Bp:(t + 1) * Bp, :]                            # (Bp, 3*Hp)
            gh = jnp.dot(h, whh, preferred_element_type=jnp.float32)     # (Bp, 3*Hp)

            r = jax.nn.sigmoid(gi_t[:, :Hp] + gh[:, :Hp])
            n = jnp.tanh(gi_t[:, Hp:2 * Hp] + r * (gh[:, Hp:2 * Hp] + bhn))
            z = jax.nn.sigmoid(gi_t[:, 2 * Hp:] + gh[:, 2 * Hp:])
            h = n + z * (h - n)                      # == (1-z)*n + z*h, one fewer op

            # lane-dense, 128-aligned, unmasked (8,128) store
            out_ref[:, t * Hp:(t + 1) * Hp] = h.astype(out_ref.dtype)

    return kernel


def make_gru_decoder(w_ih, w_hh, b_ih, b_hh):
    """Pack PyTorch-convention GRU params ONCE; return a jitted forward fn.

    w_ih: (3H, I), w_hh: (3H, H), b_ih/b_hh: (3H,), PyTorch gate order [r|z|n].
    """
    H = w_hh.shape[1]
    Hp = ((H + 127) // 128) * 128            # each gate padded to a 128-lane boundary

    # ---- one-time repacking (off the per-call path) ----
    def gate_pad_T(w):
        # PyTorch row layout [r | z | n]  ->  packed column layout [r | n | z],
        # transposed, each gate padded to Hp lanes.
        cols = []
        for g in (0, 2, 1):                                    # r, n, z
            wg = w[g * H:(g + 1) * H, :].T                     # (K, H)
            cols.append(jnp.pad(wg, ((0, 0), (0, Hp - H))))    # (K, Hp)
        return jnp.concatenate(cols, axis=1).astype(jnp.float32)

    wih_p = gate_pad_T(w_ih)                                   # (I, 3*Hp)
    whh_p = jnp.pad(gate_pad_T(w_hh), ((0, Hp - H), (0, 0)))   # (Hp, 3*Hp)

    def pad_vec(v):                                            # (H,) -> (1, Hp)
        return jnp.pad(v, (0, Hp - H)).reshape(1, Hp).astype(jnp.float32)

    b_ir, b_iz, b_in = b_ih[:H], b_ih[H:2 * H], b_ih[2 * H:]
    b_hr, b_hz, b_hn = b_hh[:H], b_hh[H:2 * H], b_hh[2 * H:]
    # Fold b_hh into the hoisted bias for r and z; keep b_hn on the recurrent side.
    bi_p = jnp.concatenate([pad_vec(b_ir + b_hr),
                            pad_vec(b_in),
                            pad_vec(b_iz + b_hz)], axis=1)     # (1, 3*Hp)
    bhn_p = pad_vec(b_hn)                                      # (1, Hp)

    wih_p, whh_p, bi_p, bhn_p = jax.block_until_ready(
        (wih_p, whh_p, bi_p, bhn_p))                           # materialize once

    @jax.jit
    def forward(next_input, input_hidden, encoder_hts=None):
        del encoder_hts                      # unused by the module (interface parity)
        B, T, I = next_input.shape
        Bp = ((B + 7) // 8) * 8              # pad batch to the 8-sublane boundary
        dtype = next_input.dtype

        # Time-major with padded batch rows: step t's gi rows form a whole
        # sublane tile, so the per-step slice in the kernel is free.
        x_tm = jnp.transpose(next_input, (1, 0, 2)).astype(jnp.float32)   # (T, B, I)
        x_tm = jnp.pad(x_tm, ((0, 0), (0, Bp - B), (0, 0)))               # (T, Bp, I)
        x2d = x_tm.reshape(T * Bp, I)

        h0_p = jnp.pad(input_hidden[0].astype(jnp.float32),
                       ((0, Bp - B), (0, Hp - H)))                        # (Bp, Hp)

        out_padded = pl.pallas_call(
            _gru_kernel(T, Bp, Hp),
            out_shape=jax.ShapeDtypeStruct((Bp, T * Hp), dtype),
            grid=(1,),
            in_specs=[
                pl.BlockSpec((T * Bp, I), lambda i: (0, 0)),      # x (time-major, flat)
                pl.BlockSpec((Bp, Hp), lambda i: (0, 0)),         # h0 (padded)
                pl.BlockSpec((I, 3 * Hp), lambda i: (0, 0)),      # W_ih^T (gate-padded)
                pl.BlockSpec((Hp, 3 * Hp), lambda i: (0, 0)),     # W_hh^T (gate-padded)
                pl.BlockSpec((1, 3 * Hp), lambda i: (0, 0)),      # folded input-side bias
                pl.BlockSpec((1, Hp), lambda i: (0, 0)),          # b_hn
            ],
            out_specs=pl.BlockSpec((Bp, T * Hp), lambda i: (0, 0)),
            compiler_params=pltpu.CompilerParams(
                dimension_semantics=("arbitrary",)),
        )(x2d, h0_p, wih_p, whh_p, bi_p, bhn_p)

        out = out_padded.reshape(Bp, T, Hp)[:B, :, :H]            # (B, T, H) batch_first
        h_n = out[:, -1, :][None]                                 # (1, B, H)
        return out, h_n

    return forward


def gru_reference(next_input, input_hidden, w_ih, w_hh, b_ih, b_hh):
    """Pure-JAX reference matching torch.nn.GRU semantics."""
    H = w_hh.shape[1]

    def step(h, x):
        gi = x @ w_ih.T + b_ih
        gh = h @ w_hh.T + b_hh
        i_r, i_z, i_n = gi[:, :H], gi[:, H:2 * H], gi[:, 2 * H:]
        h_r, h_z, h_n = gh[:, :H], gh[:, H:2 * H], gh[:, 2 * H:]
        r = jax.nn.sigmoid(i_r + h_r)
        z = jax.nn.sigmoid(i_z + h_z)
        n = jnp.tanh(i_n + r * h_n)
        h_new = (1.0 - z) * n + z * h
        return h_new, h_new

    x_tm = jnp.transpose(next_input, (1, 0, 2))
    h_last, outs = jax.lax.scan(step, input_hidden[0], x_tm)
    return jnp.transpose(outs, (1, 0, 2)), h_last[None]


if __name__ == "__main__":
    B, T, INPUT, HIDDEN = 2, 8, 32, 32
    key = jax.random.PRNGKey(0)
    ks = jax.random.split(key, 7)
    bound = 1.0 / jnp.sqrt(HIDDEN)

    next_input = jax.random.normal(ks[0], (B, T, INPUT), jnp.float32)
    input_hidden = jax.random.normal(ks[1], (1, B, HIDDEN), jnp.float32)
    encoder_hts = jax.random.normal(ks[2], (B, T, HIDDEN), jnp.float32)  # unused by the module

    w_ih = jax.random.uniform(ks[3], (3 * HIDDEN, INPUT), jnp.float32, -bound, bound)
    w_hh = jax.random.uniform(ks[4], (3 * HIDDEN, HIDDEN), jnp.float32, -bound, bound)
    b_ih = jax.random.uniform(ks[5], (3 * HIDDEN,), jnp.float32, -bound, bound)
    b_hh = jax.random.uniform(ks[6], (3 * HIDDEN,), jnp.float32, -bound, bound)

    # Pack params once (off the per-call path), then call the jitted forward.
    decoder = make_gru_decoder(w_ih, w_hh, b_ih, b_hh)
    out, h_n = decoder(next_input, input_hidden, encoder_hts)
    out = jax.block_until_ready(out)
    h_n = jax.block_until_ready(h_n)

    ref_out, ref_hn = gru_reference(next_input, input_hidden, w_ih, w_hh, b_ih, b_hh)
    assert out.shape == (B, T, HIDDEN) and h_n.shape == (1, B, HIDDEN)
    assert jnp.allclose(out, ref_out, atol=5e-5, rtol=1e-5)
    assert jnp.allclose(h_n, ref_hn, atol=5e-5, rtol=1e-5)

    print("KERNEL_OK")
</pallas_src>

<mosaic_0001>
module attributes {stable_mosaic.version = 11 : i64} {
  func.func @kernel(%arg0: i32, %arg1: memref<64x32xf32, #tpu.memory_space<vmem>>, %arg2: memref<8x128xf32, #tpu.memory_space<vmem>>, %arg3: memref<32x384xf32, #tpu.memory_space<vmem>>, %arg4: memref<128x384xf32, #tpu.memory_space<vmem>>, %arg5: memref<1x384xf32, #tpu.memory_space<vmem>>, %arg6: memref<1x128xf32, #tpu.memory_space<vmem>>, %arg7: memref<8x1024xf32, #tpu.memory_space<vmem>>) attributes {dimension_semantics = [#tpu.dimension_semantics<arbitrary>], iteration_bounds = array<i64: 1>, scalar_prefetch = 0 : i64, scratch_operands = 0 : i64, tpu.core_type = #tpu.core_type<tc>, window_params = [{pipeline_mode = #tpu.pipeline_mode<synchronous>, transform_indices = @transform_0, window_bounds = array<i64: 64, 32>}, {pipeline_mode = #tpu.pipeline_mode<synchronous>, transform_indices = @transform_1, window_bounds = array<i64: 8, 128>}, {pipeline_mode = #tpu.pipeline_mode<synchronous>, transform_indices = @transform_2, window_bounds = array<i64: 32, 384>}, {pipeline_mode = #tpu.pipeline_mode<synchronous>, transform_indices = @transform_3, window_bounds = array<i64: 128, 384>}, {pipeline_mode = #tpu.pipeline_mode<synchronous>, transform_indices = @transform_4, window_bounds = array<i64: 1, 384>}, {pipeline_mode = #tpu.pipeline_mode<synchronous>, transform_indices = @transform_5, window_bounds = array<i64: 1, 128>}, {pipeline_mode = #tpu.pipeline_mode<synchronous>, transform_indices = @transform_6, window_bounds = array<i64: 8, 1024>}]} {
    %c0 = arith.constant 0 : index
    %c0_0 = arith.constant 0 : index
    %0 = vector.load %arg1[%c0, %c0_0] : memref<64x32xf32, #tpu.memory_space<vmem>>, vector<64x32xf32>
    %c0_1 = arith.constant 0 : index
    %c0_2 = arith.constant 0 : index
    %1 = vector.load %arg3[%c0_1, %c0_2] : memref<32x384xf32, #tpu.memory_space<vmem>>, vector<32x384xf32>
    %cst = arith.constant dense<0.000000e+00> : vector<64x384xf32>
    %2 = tpu.matmul %0, %1, %cst {dimension_numbers = #tpu.dot_dimension_numbers<[1], [0], [0], [1], [0, 0, 1, 1], [], []>} : vector<64x32xf32>, vector<32x384xf32>, vector<64x384xf32> -> vector<64x384xf32>
    %c0_3 = arith.constant 0 : index
    %c0_4 = arith.constant 0 : index
    %3 = vector.load %arg5[%c0_3, %c0_4] : memref<1x384xf32, #tpu.memory_space<vmem>>, vector<1x384xf32>
    %4 = vector.broadcast %3 : vector<1x384xf32> to vector<64x384xf32>
    %5 = arith.addf %2, %4 : vector<64x384xf32>
    %c0_5 = arith.constant 0 : index
    %c0_6 = arith.constant 0 : index
    %6 = vector.load %arg2[%c0_5, %c0_6] : memref<8x128xf32, #tpu.memory_space<vmem>>, vector<8x128xf32>
    %c0_7 = arith.constant 0 : index
    %c0_8 = arith.constant 0 : index
    %7 = vector.load %arg4[%c0_7, %c0_8] : memref<128x384xf32, #tpu.memory_space<vmem>>, vector<128x384xf32>
    %c0_9 = arith.constant 0 : index
    %c0_10 = arith.constant 0 : index
    %8 = vector.load %arg6[%c0_9, %c0_10] : memref<1x128xf32, #tpu.memory_space<vmem>>, vector<1x128xf32>
    %9 = vector.shape_cast %8 : vector<1x128xf32> to vector<1x128xf32>
    %10 = vector.broadcast %9 : vector<1x128xf32> to vector<8x128xf32>
    %11 = vector.extract_strided_slice %5 {offsets = [0, 0], sizes = [8, 384], strides = [1, 1]} : vector<64x384xf32> to vector<8x384xf32>
    %cst_11 = arith.constant dense<0.000000e+00> : vector<8x384xf32>
    %12 = tpu.matmul %6, %7, %cst_11 {dimension_numbers = #tpu.dot_dimension_numbers<[1], [0], [0], [1], [0, 0, 1, 1], [], []>} : vector<8x128xf32>, vector<128x384xf32>, vector<8x384xf32> -> vector<8x384xf32>
    %13 = vector.extract_strided_slice %11 {offsets = [0, 0], sizes = [8, 128], strides = [1, 1]} : vector<8x384xf32> to vector<8x128xf32>
    %14 = vector.extract_strided_slice %12 {offsets = [0, 0], sizes = [8, 128], strides = [1, 1]} : vector<8x384xf32> to vector<8x128xf32>
    %15 = arith.addf %13, %14 : vector<8x128xf32>
    %16 = arith.negf %15 : vector<8x128xf32>
    %17 = math.exp %16 : vector<8x128xf32>
    %cst_12 = arith.constant 1.000000e+00 : f32
    %18 = vector.broadcast %cst_12 : f32 to vector<8x128xf32>
    %19 = arith.addf %18, %17 : vector<8x128xf32>
    %20 = arith.divf %18, %19 : vector<8x128xf32>
    %21 = vector.extract_strided_slice %11 {offsets = [0, 128], sizes = [8, 128], strides = [1, 1]} : vector<8x384xf32> to vector<8x128xf32>
    %22 = vector.extract_strided_slice %12 {offsets = [0, 128], sizes = [8, 128], strides = [1, 1]} : vector<8x384xf32> to vector<8x128xf32>
    %23 = arith.addf %22, %10 : vector<8x128xf32>
    %24 = arith.mulf %20, %23 : vector<8x128xf32>
    %25 = arith.addf %21, %24 : vector<8x128xf32>
    %26 = math.tanh %25 : vector<8x128xf32>
    %27 = vector.extract_strided_slice %11 {offsets = [0, 256], sizes = [8, 128], strides = [1, 1]} : vector<8x384xf32> to vector<8x128xf32>
    %28 = vector.extract_strided_slice %12 {offsets = [0, 256], sizes = [8, 128], strides = [1, 1]} : vector<8x384xf32> to vector<8x128xf32>
    %29 = arith.addf %27, %28 : vector<8x128xf32>
    %30 = arith.negf %29 : vector<8x128xf32>
    %31 = math.exp %30 : vector<8x128xf32>
    %cst_13 = arith.constant 1.000000e+00 : f32
    %32 = vector.broadcast %cst_13 : f32 to vector<8x128xf32>
    %33 = arith.addf %32, %31 : vector<8x128xf32>
    %34 = arith.divf %32, %33 : vector<8x128xf32>
    %35 = arith.subf %6, %26 : vector<8x128xf32>
    %36 = arith.mulf %34, %35 : vector<8x128xf32>
    %37 = arith.addf %26, %36 : vector<8x128xf32>
    %c0_14 = arith.constant 0 : index
    %c0_15 = arith.constant 0 : index
    %38 = vector.load %arg7[%c0_14, %c0_15] : memref<8x1024xf32, #tpu.memory_space<vmem>>, vector<8x128xf32>
    tpu.vector_store %arg7[%c0_14, %c0_15], %37 {strides = array<i32>} : memref<8x1024xf32, #tpu.memory_space<vmem>>, vector<8x128xf32>,
    %39 = vector.extract_strided_slice %5 {offsets = [8, 0], sizes = [8, 384], strides = [1, 1]} : vector<64x384xf32> to vector<8x384xf32>
    %cst_16 = arith.constant dense<0.000000e+00> : vector<8x384xf32>
    %40 = tpu.matmul %37, %7, %cst_16 {dimension_numbers = #tpu.dot_dimension_numbers<[1], [0], [0], [1], [0, 0, 1, 1], [], []>} : vector<8x128xf32>, vector<128x384xf32>, vector<8x384xf32> -> vector<8x384xf32>
    %41 = vector.extract_strided_slice %39 {offsets = [0, 0], sizes = [8, 128], strides = [1, 1]} : vector<8x384xf32> to vector<8x128xf32>
    %42 = vector.extract_strided_slice %40 {offsets = [0, 0], sizes = [8, 128], strides = [1, 1]} : vector<8x384xf32> to vector<8x128xf32>
    %43 = arith.addf %41, %42 : vector<8x128xf32>
    %44 = arith.negf %43 : vector<8x128xf32>
    %45 = math.exp %44 : vector<8x128xf32>
    %cst_17 = arith.constant 1.000000e+00 : f32
    %46 = vector.broadcast %cst_17 : f32 to vector<8x128xf32>
    %47 = arith.addf %46, %45 : vector<8x128xf32>
    %48 = arith.divf %46, %47 : vector<8x128xf32>
    %49 = vector.extract_strided_slice %39 {offsets = [0, 128], sizes = [8, 128], strides = [1, 1]} : vector<8x384xf32> to vector<8x128xf32>
    %50 = vector.extract_strided_slice %40 {offsets = [0, 128], sizes = [8, 128], strides = [1, 1]} : vector<8x384xf32> to vector<8x128xf32>
    %51 = arith.addf %50, %10 : vector<8x128xf32>
    %52 = arith.mulf %48, %51 : vector<8x128xf32>
    %53 = arith.addf %49, %52 : vector<8x128xf32>
    %54 = math.tanh %53 : vector<8x128xf32>
    %55 = vector.extract_strided_slice %39 {offsets = [0, 256], sizes = [8, 128], strides = [1, 1]} : vector<8x384xf32> to vector<8x128xf32>
    %56 = vector.extract_strided_slice %40 {offsets = [0, 256], sizes = [8, 128], strides = [1, 1]} : vector<8x384xf32> to vector<8x128xf32>
    %57 = arith.addf %55, %56 : vector<8x128xf32>
    %58 = arith.negf %57 : vector<8x128xf32>
    %59 = math.exp %58 : vector<8x128xf32>
    %cst_18 = arith.constant 1.000000e+00 : f32
    %60 = vector.broadcast %cst_18 : f32 to vector<8x128xf32>
    %61 = arith.addf %60, %59 : vector<8x128xf32>
    %62 = arith.divf %60, %61 : vector<8x128xf32>
    %63 = arith.subf %37, %54 : vector<8x128xf32>
    %64 = arith.mulf %62, %63 : vector<8x128xf32>
    %65 = arith.addf %54, %64 : vector<8x128xf32>
    %c0_19 = arith.constant 0 : index
    %c128 = arith.constant 128 : index
    %66 = vector.load %arg7[%c0_19, %c128] : memref<8x1024xf32, #tpu.memory_space<vmem>>, vector<8x128xf32>
    tpu.vector_store %arg7[%c0_19, %c128], %65 {strides = array<i32>} : memref<8x1024xf32, #tpu.memory_space<vmem>>, vector<8x128xf32>,
    %67 = vector.extract_strided_slice %5 {offsets = [16, 0], sizes = [8, 384], strides = [1, 1]} : vector<64x384xf32> to vector<8x384xf32>
    %cst_20 = arith.constant dense<0.000000e+00> : vector<8x384xf32>
    %68 = tpu.matmul %65, %7, %cst_20 {dimension_numbers = #tpu.dot_dimension_numbers<[1], [0], [0], [1], [0, 0, 1, 1], [], []>} : vector<8x128xf32>, vector<128x384xf32>, vector<8x384xf32> -> vector<8x384xf32>
    %69 = vector.extract_strided_slice %67 {offsets = [0, 0], sizes = [8, 128], strides = [1, 1]} : vector<8x384xf32> to vector<8x128xf32>
    %70 = vector.extract_strided_slice %68 {offsets = [0, 0], sizes = [8, 128], strides = [1, 1]} : vector<8x384xf32> to vector<8x128xf32>
    %71 = arith.addf %69, %70 : vector<8x128xf32>
    %72 = arith.negf %71 : vector<8x128xf32>
    %73 = math.exp %72 : vector<8x128xf32>
    %cst_21 = arith.constant 1.000000e+00 : f32
    %74 = vector.broadcast %cst_21 : f32 to vector<8x128xf32>
    %75 = arith.addf %74, %73 : vector<8x128xf32>
    %76 = arith.divf %74, %75 : vector<8x128xf32>
    %77 = vector.extract_strided_slice %67 {offsets = [0, 128], sizes = [8, 128], strides = [1, 1]} : vector<8x384xf32> to vector<8x128xf32>
    %78 = vector.extract_strided_slice %68 {offsets = [0, 128], sizes = [8, 128], strides = [1, 1]} : vector<8x384xf32> to vector<8x128xf32>
    %79 = arith.addf %78, %10 : vector<8x128xf32>
    %80 = arith.mulf %76, %79 : vector<8x128xf32>
    %81 = arith.addf %77, %80 : vector<8x128xf32>
    %82 = math.tanh %81 : vector<8x128xf32>
    %83 = vector.extract_strided_slice %67 {offsets = [0, 256], sizes = [8, 128], strides = [1, 1]} : vector<8x384xf32> to vector<8x128xf32>
    %84 = vector.extract_strided_slice %68 {offsets = [0, 256], sizes = [8, 128], strides = [1, 1]} : vector<8x384xf32> to vector<8x128xf32>
    %85 = arith.addf %83, %84 : vector<8x128xf32>
    %86 = arith.negf %85 : vector<8x128xf32>
    %87 = math.exp %86 : vector<8x128xf32>
    %cst_22 = arith.constant 1.000000e+00 : f32
    %88 = vector.broadcast %cst_22 : f32 to vector<8x128xf32>
    %89 = arith.addf %88, %87 : vector<8x128xf32>
    %90 = arith.divf %88, %89 : vector<8x128xf32>
    %91 = arith.subf %65, %82 : vector<8x128xf32>
    %92 = arith.mulf %90, %91 : vector<8x128xf32>
    %93 = arith.addf %82, %92 : vector<8x128xf32>
    %c0_23 = arith.constant 0 : index
    %c256 = arith.constant 256 : index
    %94 = vector.load %arg7[%c0_23, %c256] : memref<8x1024xf32, #tpu.memory_space<vmem>>, vector<8x128xf32>
    tpu.vector_store %arg7[%c0_23, %c256], %93 {strides = array<i32>} : memref<8x1024xf32, #tpu.memory_space<vmem>>, vector<8x128xf32>,
    %95 = vector.extract_strided_slice %5 {offsets = [24, 0], sizes = [8, 384], strides = [1, 1]} : vector<64x384xf32> to vector<8x384xf32>
    %cst_24 = arith.constant dense<0.000000e+00> : vector<8x384xf32>
    %96 = tpu.matmul %93, %7, %cst_24 {dimension_numbers = #tpu.dot_dimension_numbers<[1], [0], [0], [1], [0, 0, 1, 1], [], []>} : vector<8x128xf32>, vector<128x384xf32>, vector<8x384xf32> -> vector<8x384xf32>
    %97 = vector.extract_strided_slice %95 {offsets = [0, 0], sizes = [8, 128], strides = [1, 1]} : vector<8x384xf32> to vector<8x128xf32>
    %98 = vector.extract_strided_slice %96 {offsets = [0, 0], sizes = [8, 128], strides = [1, 1]} : vector<8x384xf32> to vector<8x128xf32>
    %99 = arith.addf %97, %98 : vector<8x128xf32>
    %100 = arith.negf %99 : vector<8x128xf32>
    %101 = math.exp %100 : vector<8x128xf32>
    %cst_25 = arith.constant 1.000000e+00 : f32
    %102 = vector.broadcast %cst_25 : f32 to vector<8x128xf32>
    %103 = arith.addf %102, %101 : vector<8x128xf32>
    %104 = arith.divf %102, %103 : vector<8x128xf32>
    %105 = vector.extract_strided_slice %95 {offsets = [0, 128], sizes = [8, 128], strides = [1, 1]} : vector<8x384xf32> to vector<8x128xf32>
    %106 = vector.extract_strided_slice %96 {offsets = [0, 128], sizes = [8, 128], strides = [1, 1]} : vector<8x384xf32> to vector<8x128xf32>
    %107 = arith.addf %106, %10 : vector<8x128xf32>
    %108 = arith.mulf %104, %107 : vector<8x128xf32>
    %109 = arith.addf %105, %108 : vector<8x128xf32>
    %110 = math.tanh %109 : vector<8x128xf32>
    %111 = vector.extract_strided_slice %95 {offsets = [0, 256], sizes = [8, 128], strides = [1, 1]} : vector<8x384xf32> to vector<8x128xf32>
    %112 = vector.extract_strided_slice %96 {offsets = [0, 256], sizes = [8, 128], strides = [1, 1]} : vector<8x384xf32> to vector<8x128xf32>
    %113 = arith.addf %111, %112 : vector<8x128xf32>
    %114 = arith.negf %113 : vector<8x128xf32>
    %115 = math.exp %114 : vector<8x128xf32>
    %cst_26 = arith.constant 1.000000e+00 : f32
    %116 = vector.broadcast %cst_26 : f32 to vector<8x128xf32>
    %117 = arith.addf %116, %115 : vector<8x128xf32>
    %118 = arith.divf %116, %117 : vector<8x128xf32>
    %119 = arith.subf %93, %110 : vector<8x128xf32>
    %120 = arith.mulf %118, %119 : vector<8x128xf32>
    %121 = arith.addf %110, %120 : vector<8x128xf32>
    %c0_27 = arith.constant 0 : index
    %c384 = arith.constant 384 : index
    %122 = vector.load %arg7[%c0_27, %c384] : memref<8x1024xf32, #tpu.memory_space<vmem>>, vector<8x128xf32>
    tpu.vector_store %arg7[%c0_27, %c384], %121 {strides = array<i32>} : memref<8x1024xf32, #tpu.memory_space<vmem>>, vector<8x128xf32>,
    %123 = vector.extract_strided_slice %5 {offsets = [32, 0], sizes = [8, 384], strides = [1, 1]} : vector<64x384xf32> to vector<8x384xf32>
    %cst_28 = arith.constant dense<0.000000e+00> : vector<8x384xf32>
    %124 = tpu.matmul %121, %7, %cst_28 {dimension_numbers = #tpu.dot_dimension_numbers<[1], [0], [0], [1], [0, 0, 1, 1], [], []>} : vector<8x128xf32>, vector<128x384xf32>, vector<8x384xf32> -> vector<8x384xf32>
    %125 = vector.extract_strided_slice %123 {offsets = [0, 0], sizes = [8, 128], strides = [1, 1]} : vector<8x384xf32> to vector<8x128xf32>
    %126 = vector.extract_strided_slice %124 {offsets = [0, 0], sizes = [8, 128], strides = [1, 1]} : vector<8x384xf32> to vector<8x128xf32>
    %127 = arith.addf %125, %126 : vector<8x128xf32>
    %128 = arith.negf %127 : vector<8x128xf32>
    %129 = math.exp %128 : vector<8x128xf32>
    %cst_29 = arith.constant 1.000000e+00 : f32
    %130 = vector.broadcast %cst_29 : f32 to vector<8x128xf32>
    %131 = arith.addf %130, %129 : vector<8x128xf32>
    %132 = arith.divf %130, %131 : vector<8x128xf32>
    %133 = vector.extract_strided_slice %123 {offsets = [0, 128], sizes = [8, 128], strides = [1, 1]} : vector<8x384xf32> to vector<8x128xf32>
    %134 = vector.extract_strided_slice %124 {offsets = [0, 128], sizes = [8, 128], strides = [1, 1]} : vector<8x384xf32> to vector<8x128xf32>
    %135 = arith.addf %134, %10 : vector<8x128xf32>
    %136 = arith.mulf %132, %135 : vector<8x128xf32>
    %137 = arith.addf %133, %136 : vector<8x128xf32>
    %138 = math.tanh %137 : vector<8x128xf32>
    %139 = vector.extract_strided_slice %123 {offsets = [0, 256], sizes = [8, 128], strides = [1, 1]} : vector<8x384xf32> to vector<8x128xf32>
    %140 = vector.extract_strided_slice %124 {offsets = [0, 256], sizes = [8, 128], strides = [1, 1]} : vector<8x384xf32> to vector<8x128xf32>
    %141 = arith.addf %139, %140 : vector<8x128xf32>
    %142 = arith.negf %141 : vector<8x128xf32>
    %143 = math.exp %142 : vector<8x128xf32>
    %cst_30 = arith.constant 1.000000e+00 : f32
    %144 = vector.broadcast %cst_30 : f32 to vector<8x128xf32>
    %145 = arith.addf %144, %143 : vector<8x128xf32>
    %146 = arith.divf %144, %145 : vector<8x128xf32>
    %147 = arith.subf %121, %138 : vector<8x128xf32>
    %148 = arith.mulf %146, %147 : vector<8x128xf32>
    %149 = arith.addf %138, %148 : vector<8x128xf32>
    %c0_31 = arith.constant 0 : index
    %c512 = arith.constant 512 : index
    %150 = vector.load %arg7[%c0_31, %c512] : memref<8x1024xf32, #tpu.memory_space<vmem>>, vector<8x128xf32>
    tpu.vector_store %arg7[%c0_31, %c512], %149 {strides = array<i32>} : memref<8x1024xf32, #tpu.memory_space<vmem>>, vector<8x128xf32>,
    %151 = vector.extract_strided_slice %5 {offsets = [40, 0], sizes = [8, 384], strides = [1, 1]} : vector<64x384xf32> to vector<8x384xf32>
    %cst_32 = arith.constant dense<0.000000e+00> : vector<8x384xf32>
    %152 = tpu.matmul %149, %7, %cst_32 {dimension_numbers = #tpu.dot_dimension_numbers<[1], [0], [0], [1], [0, 0, 1, 1], [], []>} : vector<8x128xf32>, vector<128x384xf32>, vector<8x384xf32> -> vector<8x384xf32>
    %153 = vector.extract_strided_slice %151 {offsets = [0, 0], sizes = [8, 128], strides = [1, 1]} : vector<8x384xf32> to vector<8x128xf32>
    %154 = vector.extract_strided_slice %152 {offsets = [0, 0], sizes = [8, 128], strides = [1, 1]} : vector<8x384xf32> to vector<8x128xf32>
    %155 = arith.addf %153, %154 : vector<8x128xf32>
    %156 = arith.negf %155 : vector<8x128xf32>
    %157 = math.exp %156 : vector<8x128xf32>
    %cst_33 = arith.constant 1.000000e+00 : f32
    %158 = vector.broadcast %cst_33 : f32 to vector<8x128xf32>
    %159 = arith.addf %158, %157 : vector<8x128xf32>
    %160 = arith.divf %158, %159 : vector<8x128xf32>
    %161 = vector.extract_strided_slice %151 {offsets = [0, 128], sizes = [8, 128], strides = [1, 1]} : vector<8x384xf32> to vector<8x128xf32>
    %162 = vector.extract_strided_slice %152 {offsets = [0, 128], sizes = [8, 128], strides = [1, 1]} : vector<8x384xf32> to vector<8x128xf32>
    %163 = arith.addf %162, %10 : vector<8x128xf32>
    %164 = arith.mulf %160, %163 : vector<8x128xf32>
    %165 = arith.addf %161, %164 : vector<8x128xf32>
    %166 = math.tanh %165 : vector<8x128xf32>
    %167 = vector.extract_strided_slice %151 {offsets = [0, 256], sizes = [8, 128], strides = [1, 1]} : vector<8x384xf32> to vector<8x128xf32>
    %168 = vector.extract_strided_slice %152 {offsets = [0, 256], sizes = [8, 128], strides = [1, 1]} : vector<8x384xf32> to vector<8x128xf32>
    %169 = arith.addf %167, %168 : vector<8x128xf32>
    %170 = arith.negf %169 : vector<8x128xf32>
    %171 = math.exp %170 : vector<8x128xf32>
    %cst_34 = arith.constant 1.000000e+00 : f32
    %172 = vector.broadcast %cst_34 : f32 to vector<8x128xf32>
    %173 = arith.addf %172, %171 : vector<8x128xf32>
    %174 = arith.divf %172, %173 : vector<8x128xf32>
    %175 = arith.subf %149, %166 : vector<8x128xf32>
    %176 = arith.mulf %174, %175 : vector<8x128xf32>
    %177 = arith.addf %166, %176 : vector<8x128xf32>
    %c0_35 = arith.constant 0 : index
    %c640 = arith.constant 640 : index
    %178 = vector.load %arg7[%c0_35, %c640] : memref<8x1024xf32, #tpu.memory_space<vmem>>, vector<8x128xf32>
    tpu.vector_store %arg7[%c0_35, %c640], %177 {strides = array<i32>} : memref<8x1024xf32, #tpu.memory_space<vmem>>, vector<8x128xf32>,
    %179 = vector.extract_strided_slice %5 {offsets = [48, 0], sizes = [8, 384], strides = [1, 1]} : vector<64x384xf32> to vector<8x384xf32>
    %cst_36 = arith.constant dense<0.000000e+00> : vector<8x384xf32>
    %180 = tpu.matmul %177, %7, %cst_36 {dimension_numbers = #tpu.dot_dimension_numbers<[1], [0], [0], [1], [0, 0, 1, 1], [], []>} : vector<8x128xf32>, vector<128x384xf32>, vector<8x384xf32> -> vector<8x384xf32>
    %181 = vector.extract_strided_slice %179 {offsets = [0, 0], sizes = [8, 128], strides = [1, 1]} : vector<8x384xf32> to vector<8x128xf32>
    %182 = vector.extract_strided_slice %180 {offsets = [0, 0], sizes = [8, 128], strides = [1, 1]} : vector<8x384xf32> to vector<8x128xf32>
    %183 = arith.addf %181, %182 : vector<8x128xf32>
    %184 = arith.negf %183 : vector<8x128xf32>
    %185 = math.exp %184 : vector<8x128xf32>
    %cst_37 = arith.constant 1.000000e+00 : f32
    %186 = vector.broadcast %cst_37 : f32 to vector<8x128xf32>
    %187 = arith.addf %186, %185 : vector<8x128xf32>
    %188 = arith.divf %186, %187 : vector<8x128xf32>
    %189 = vector.extract_strided_slice %179 {offsets = [0, 128], sizes = [8, 128], strides = [1, 1]} : vector<8x384xf32> to vector<8x128xf32>
    %190 = vector.extract_strided_slice %180 {offsets = [0, 128], sizes = [8, 128], strides = [1, 1]} : vector<8x384xf32> to vector<8x128xf32>
    %191 = arith.addf %190, %10 : vector<8x128xf32>
    %192 = arith.mulf %188, %191 : vector<8x128xf32>
    %193 = arith.addf %189, %192 : vector<8x128xf32>
    %194 = math.tanh %193 : vector<8x128xf32>
    %195 = vector.extract_strided_slice %179 {offsets = [0, 256], sizes = [8, 128], strides = [1, 1]} : vector<8x384xf32> to vector<8x128xf32>
    %196 = vector.extract_strided_slice %180 {offsets = [0, 256], sizes = [8, 128], strides = [1, 1]} : vector<8x384xf32> to vector<8x128xf32>
    %197 = arith.addf %195, %196 : vector<8x128xf32>
    %198 = arith.negf %197 : vector<8x128xf32>
    %199 = math.exp %198 : vector<8x128xf32>
    %cst_38 = arith.constant 1.000000e+00 : f32
    %200 = vector.broadcast %cst_38 : f32 to vector<8x128xf32>
    %201 = arith.addf %200, %199 : vector<8x128xf32>
    %202 = arith.divf %200, %201 : vector<8x128xf32>
    %203 = arith.subf %177, %194 : vector<8x128xf32>
    %204 = arith.mulf %202, %203 : vector<8x128xf32>
    %205 = arith.addf %194, %204 : vector<8x128xf32>
    %c0_39 = arith.constant 0 : index
    %c768 = arith.constant 768 : index
    %206 = vector.load %arg7[%c0_39, %c768] : memref<8x1024xf32, #tpu.memory_space<vmem>>, vector<8x128xf32>
    tpu.vector_store %arg7[%c0_39, %c768], %205 {strides = array<i32>} : memref<8x1024xf32, #tpu.memory_space<vmem>>, vector<8x128xf32>,
    %207 = vector.extract_strided_slice %5 {offsets = [56, 0], sizes = [8, 384], strides = [1, 1]} : vector<64x384xf32> to vector<8x384xf32>
    %cst_40 = arith.constant dense<0.000000e+00> : vector<8x384xf32>
    %208 = tpu.matmul %205, %7, %cst_40 {dimension_numbers = #tpu.dot_dimension_numbers<[1], [0], [0], [1], [0, 0, 1, 1], [], []>} : vector<8x128xf32>, vector<128x384xf32>, vector<8x384xf32> -> vector<8x384xf32>
    %209 = vector.extract_strided_slice %207 {offsets = [0, 0], sizes = [8, 128], strides = [1, 1]} : vector<8x384xf32> to vector<8x128xf32>
    %210 = vector.extract_strided_slice %208 {offsets = [0, 0], sizes = [8, 128], strides = [1, 1]} : vector<8x384xf32> to vector<8x128xf32>
    %211 = arith.addf %209, %210 : vector<8x128xf32>
    %212 = arith.negf %211 : vector<8x128xf32>
    %213 = math.exp %212 : vector<8x128xf32>
    %cst_41 = arith.constant 1.000000e+00 : f32
    %214 = vector.broadcast %cst_41 : f32 to vector<8x128xf32>
    %215 = arith.addf %214, %213 : vector<8x128xf32>
    %216 = arith.divf %214, %215 : vector<8x128xf32>
    %217 = vector.extract_strided_slice %207 {offsets = [0, 128], sizes = [8, 128], strides = [1, 1]} : vector<8x384xf32> to vector<8x128xf32>
    %218 = vector.extract_strided_slice %208 {offsets = [0, 128], sizes = [8, 128], strides = [1, 1]} : vector<8x384xf32> to vector<8x128xf32>
    %219 = arith.addf %218, %10 : vector<8x128xf32>
    %220 = arith.mulf %216, %219 : vector<8x128xf32>
    %221 = arith.addf %217, %220 : vector<8x128xf32>
    %222 = math.tanh %221 : vector<8x128xf32>
    %223 = vector.extract_strided_slice %207 {offsets = [0, 256], sizes = [8, 128], strides = [1, 1]} : vector<8x384xf32> to vector<8x128xf32>
    %224 = vector.extract_strided_slice %208 {offsets = [0, 256], sizes = [8, 128], strides = [1, 1]} : vector<8x384xf32> to vector<8x128xf32>
    %225 = arith.addf %223, %224 : vector<8x128xf32>
    %226 = arith.negf %225 : vector<8x128xf32>
    %227 = math.exp %226 : vector<8x128xf32>
    %cst_42 = arith.constant 1.000000e+00 : f32
    %228 = vector.broadcast %cst_42 : f32 to vector<8x128xf32>
    %229 = arith.addf %228, %227 : vector<8x128xf32>
    %230 = arith.divf %228, %229 : vector<8x128xf32>
    %231 = arith.subf %205, %222 : vector<8x128xf32>
    %232 = arith.mulf %230, %231 : vector<8x128xf32>
    %233 = arith.addf %222, %232 : vector<8x128xf32>
    %c0_43 = arith.constant 0 : index
    %c896 = arith.constant 896 : index
    %234 = vector.load %arg7[%c0_43, %c896] : memref<8x1024xf32, #tpu.memory_space<vmem>>, vector<8x128xf32>
    tpu.vector_store %arg7[%c0_43, %c896], %233 {strides = array<i32>} : memref<8x1024xf32, #tpu.memory_space<vmem>>, vector<8x128xf32>,
    return
  }
  func.func @transform_0(%arg0: i32) -> (i32, i32) {
    %c0_i32 = arith.constant 0 : i32
    %c0_i32_0 = arith.constant 0 : i32
    %c0_i32_1 = arith.constant 0 : i32
    return %c0_i32, %c0_i32_0 : i32, i32
  }
  func.func @transform_1(%arg0: i32) -> (i32, i32) {
    %c0_i32 = arith.constant 0 : i32
    %c0_i32_0 = arith.constant 0 : i32
    %c0_i32_1 = arith.constant 0 : i32
    return %c0_i32, %c0_i32_0 : i32, i32
  }
  func.func @transform_2(%arg0: i32) -> (i32, i32) {
    %c0_i32 = arith.constant 0 : i32
    %c0_i32_0 = arith.constant 0 : i32
    %c0_i32_1 = arith.constant 0 : i32
    return %c0_i32, %c0_i32_0 : i32, i32
  }
  func.func @transform_3(%arg0: i32) -> (i32, i32) {
    %c0_i32 = arith.constant 0 : i32
    %c0_i32_0 = arith.constant 0 : i32
    %c0_i32_1 = arith.constant 0 : i32
    return %c0_i32, %c0_i32_0 : i32, i32
  }
  func.func @transform_4(%arg0: i32) -> (i32, i32) {
    %c0_i32 = arith.constant 0 : i32
    %c0_i32_0 = arith.constant 0 : i32
    %c0_i32_1 = arith.constant 0 : i32
    return %c0_i32, %c0_i32_0 : i32, i32
  }
  func.func @transform_5(%arg0: i32) -> (i32, i32) {
    %c0_i32 = arith.constant 0 : i32
    %c0_i32_0 = arith.constant 0 : i32
    %c0_i32_1 = arith.constant 0 : i32
    return %c0_i32, %c0_i32_0 : i32, i32
  }
  func.func @transform_6(%arg0: i32) -> (i32, i32) {
    %c0_i32 = arith.constant 0 : i32
    %c0_i32_0 = arith.constant 0 : i32
    %c0_i32_1 = arith.constant 0 : i32
    return %c0_i32, %c0_i32_0 : i32, i32
  }
}

</mosaic_0001>

<llo_original>
// kernel: forward.1
$region0: #{forward.1}
  #allocation0 [shape = 'u32[]', space=smem, size = 0x4, offset = 0x4, fixed_abs, tag = 'smem constant byte address 0x4 - core index']
  #allocation1 [shape = 'u32[144,128]{1,0:T(1,128)}', space=vmem, size = 0x12000, scoped, tag = 'internal scratch']
  %s0 = inlined_call_operand.vmem [shape: f32[64,32], index: 0, kind: input, shape index: {}]
  %s1 = inlined_call_operand.vmem [shape: f32[8,128], index: 1, kind: input, shape index: {}]
  %s2 = inlined_call_operand.vmem [shape: f32[32,384], index: 2, kind: input, shape index: {}]
  %s3 = inlined_call_operand.hbm [shape: f32[128,384], index: 3, kind: input, shape index: {}]
  %s4 = inlined_call_operand.vmem [shape: f32[1,384], index: 4, kind: input, shape index: {}]
  %s5 = inlined_call_operand.vmem [shape: f32[1,128], index: 5, kind: input, shape index: {}]
  %s6 = inlined_call_operand.vmem [shape: f32[8,1024], index: 6, kind: output, shape index: {}]
  %s7 = sld [smem:[#allocation0]]
  $region38: #{forward.1} parent=0
    _
  %s9 = ssub.s32 1, %s7
  %s10 = scalar_select 0, %s9, %s7
  $region1: #{forward.1} parent=0
    #allocation2 [shape = 'u8[196608]{0}', space=vmem, size = 0x30000, scoped, tag = 'input window, operand 3, single buffered']
    #allocation3 [shape = 's32[1]{0}', space=sflag, size = 0x4, scoped, tag = 'scoped memory for forward.1']
    %11 = vsyncpa [#allocation3], 0
    // Predicated region
    $region2: #{forward.1} parent=1 // pred_check
      _
    $region3: #{forward.1} parent=1 // pred_check_branch
      %13 = sbr.rel (0) target = $region5
    $region4: #{forward.1} parent=1 // pred_region
      _
    $region5: #{forward.1} parent=1 // pred_fallthru
      _
    // Predicated region
    $region6: #{forward.1} parent=1 // pred_check
      _
    $region7: #{forward.1} parent=1 // pred_check_branch
      %15 = sbr.rel (0) target = $region9
    $region8: #{forward.1} parent=1 // pred_region
      _
    $region9: #{forward.1} parent=1 // pred_fallthru
      _
    // Predicated region
    $region10: #{forward.1} parent=1 // pred_check
      _
    $region11: #{forward.1} parent=1 // pred_check_branch
      %17 = sbr.rel (0) target = $region13
    $region12: #{forward.1} parent=1 // pred_region
      _
    $region13: #{forward.1} parent=1 // pred_fallthru
      _
    // Predicated region
    $region14: #{forward.1} parent=1 // pred_check
      _
    $region15: #{forward.1} parent=1 // pred_check_branch
      %19 = sbr.rel (0) target = $region17
    $region16: #{forward.1} parent=1 // pred_region
      %s21 = ssub.s32 6144, 6144
      %22 = vsyncadd [#allocation3], %s21
      %s23 = sshll.u32 [#allocation2], 4
      %s24 = int_to_ptr.vmem [resolvable:$true] %s23
      %29 = dma.hbm_to_vmem [thread:$0]  %s3, 6144, %s24, [#allocation3], 384, 384, 24
    $region17: #{forward.1} parent=1 // pred_fallthru
      _
    // Predicated region
    $region18: #{forward.1} parent=1 // pred_check
      _
    $region19: #{forward.1} parent=1 // pred_check_branch
      %31 = sbr.rel (0) target = $region21
    $region20: #{forward.1} parent=1 // pred_region
      _
    $region21: #{forward.1} parent=1 // pred_fallthru
      _
    // Predicated region
    $region22: #{forward.1} parent=1 // pred_check
      _
    $region23: #{forward.1} parent=1 // pred_check_branch
      %33 = sbr.rel (0) target = $region25
    $region24: #{forward.1} parent=1 // pred_region
      _
    $region25: #{forward.1} parent=1 // pred_fallthru
      _
    // Predicated region
    $region26: #{forward.1} parent=1 // pred_check
      _
    $region27: #{forward.1} parent=1 // pred_check_branch
      %35 = sbr.rel (0) target = $region29
    $region28: #{forward.1} parent=1 // pred_region
      %36 = dma.done [#allocation3], 6144
    $region29: #{forward.1} parent=1 // pred_fallthru
      _
    %v37 = vld [vmem:[%s0] sm:$0xff]
    %v38 = vld [vmem:[%s0 + $0x8] sm:$0xff]
    %v39 = vld [vmem:[%s0 + $0x10] sm:$0xff]
    %v40 = vld [vmem:[%s0 + $0x18] sm:$0xff]
    %v41 = vld [vmem:[%s0 + $0x20] sm:$0xff]
    %v42 = vld [vmem:[%s0 + $0x28] sm:$0xff]
    %v43 = vld [vmem:[%s0 + $0x30] sm:$0xff]
    %v44 = vld [vmem:[%s0 + $0x38] sm:$0xff]
    %v45 = vld [vmem:[%s2] sm:$0xff]
    %v46 = vld [vmem:[%s2 + $0x8] sm:$0xff]
    %v47 = vld [vmem:[%s2 + $0x10] sm:$0xff]
    %v48 = vld [vmem:[%s2 + $0x18] sm:$0xff]
    %v49 = vld [vmem:[%s2 + $0x20] sm:$0xff]
    %v50 = vld [vmem:[%s2 + $0x28] sm:$0xff]
    %v51 = vld [vmem:[%s2 + $0x30] sm:$0xff]
    %v52 = vld [vmem:[%s2 + $0x38] sm:$0xff]
    %v53 = vld [vmem:[%s2 + $0x40] sm:$0xff]
    %v54 = vld [vmem:[%s2 + $0x48] sm:$0xff]
    %v55 = vld [vmem:[%s2 + $0x50] sm:$0xff]
    %v56 = vld [vmem:[%s2 + $0x58] sm:$0xff]
    %v57 = vld [vmem:[%s4] sm:$0x7]
    %v59 = vlaneseq
    %v60 = vshrl.u32 %v59, 7
    %v61 = vsub.s32 0, %v60
    %v62 = vrot.slane %v57, %v61
    %v63 = vlaneseq
    %v64 = vshrl.u32 %v63, 7
    %v65 = vsub.s32 1, %v64
    %v66 = vrot.slane %v57, %v65
    %v67 = vlaneseq
    %v68 = vshrl.u32 %v67, 7
    %v69 = vsub.s32 2, %v68
    %v70 = vrot.slane %v57, %v69
    %vm74 = vcmask 261120
    %v76 = vsel %vm74, %v37, 0
    %v79 = vsel %vm74, %v38, 0
    %v82 = vsel %vm74, %v39, 0
    %v85 = vsel %vm74, %v40, 0
    %v88 = vsel %vm74, %v41, 0
    %v91 = vsel %vm74, %v42, 0
    %v94 = vsel %vm74, %v43, 0
    %v97 = vsel %vm74, %v44, 0
    %99 = vmatprep.subr.mxu0 0.0
    %100 = vmatpush1.msra.mxu0 0.0
    %101 = vmatprep.subr.mxu0 0.0
    %102 = vmatpush1.msra.mxu0 0.0
    %103 = vmatprep.subr.mxu0 0.0
    %104 = vmatpush1.msra.mxu0 0.0
    %105 = vmatprep.subr.mxu0 0.0
    %106 = vmatpush1.msra.mxu0 0.0
    %107 = vmatprep.subr.mxu0 0.0
    %108 = vmatpush1.msra.mxu0 0.0
    %109 = vmatprep.subr.mxu0 0.0
    %110 = vmatpush1.msra.mxu0 0.0
    %111 = vmatprep.subr.mxu0 0.0
    %112 = vmatpush1.msra.mxu0 0.0
    %113 = vmatprep.subr.mxu0 0.0
    %114 = vmatpush1.msra.mxu0 0.0
    %115 = vmatprep.subr.mxu0 0.0
    %116 = vmatpush1.msra.mxu0 0.0
    %117 = vmatprep.subr.mxu0 0.0
    %118 = vmatpush1.msra.mxu0 0.0
    %119 = vmatprep.subr.mxu0 0.0
    %120 = vmatpush1.msra.mxu0 0.0
    %121 = vmatprep.subr.mxu0 0.0
    %122 = vmatpush1.msra.mxu0 0.0
    %123 = vmatprep.subr.mxu0 %v55
    %124 = vmatpush1.msra.mxu0 %v54
    %125 = vmatprep.subr.mxu0 %v52
    %126 = vmatpush1.msra.mxu0 %v51
    %127 = vmatprep.subr.mxu0 %v49
    %128 = vmatpush1.msra.mxu0 %v48
    %129 = vmatprep.subr.mxu0 %v46
    %130 = vmatpush1.msra.mxu0 %v45
    %131 = vmatprep.subr.mxu0 0.0
    %132 = vmatpush2.msra.mxu0 0.0
    %133 = vmatprep.subr.mxu0 0.0
    %134 = vmatpush2.msra.mxu0 0.0
    %135 = vmatprep.subr.mxu0 0.0
    %136 = vmatpush2.msra.mxu0 0.0
    %137 = vmatprep.subr.mxu0 0.0
    %138 = vmatpush2.msra.mxu0 0.0
    %139 = vmatprep.subr.mxu0 0.0
    %140 = vmatpush2.msra.mxu0 0.0
    %141 = vmatprep.subr.mxu0 0.0
    %142 = vmatpush2.msra.mxu0 0.0
    %143 = vmatprep.subr.mxu0 0.0
    %144 = vmatpush2.msra.mxu0 0.0
    %145 = vmatprep.subr.mxu0 0.0
    %146 = vmatpush2.msra.mxu0 0.0
    %147 = vmatprep.subr.mxu0 0.0
    %148 = vmatpush2.msra.mxu0 0.0
    %149 = vmatprep.subr.mxu0 0.0
    %150 = vmatpush2.msra.mxu0 0.0
    %151 = vmatprep.subr.mxu0 0.0
    %152 = vmatpush2.msra.mxu0 0.0
    %153 = vmatprep.subr.mxu0 0.0
    %154 = vmatpush2.msra.mxu0 0.0
    %155 = vmatprep.subr.mxu0 0.0
    %156 = vmatpush2.msra.mxu0 0.0
    %157 = vmatprep.subr.mxu0 0.0
    %158 = vmatpush2.msra.mxu0 0.0
    %159 = vmatprep.subr.mxu0 0.0
    %160 = vmatpush2.msra.mxu0 0.0
    %161 = vmatprep.subr.mxu0 0.0
    %162 = vmatpush2.msra.mxu0 0.0
    %163 = vmatprep.mubr.f32.mxu0 0.0
    %164 = vmatmul.mubr.f32.gmra.mxu0 %v76
    %v165 = vpop.f32.mrf.mxu0
    %v166 = vadd.f32 %v62, %v165
    %v167 = vpop.f32.mrf.mxu0
    %v168 = vadd.f32 %v66, %v167
    %169 = vmatprep.mubr.f32.mxu0 0.0
    %170 = vmatmul.mubr.f32.gmra.mxu0 %v79
    %v171 = vpop.f32.mrf.mxu0
    %v172 = vadd.f32 %v62, %v171
    %v173 = vpop.f32.mrf.mxu0
    %v174 = vadd.f32 %v66, %v173
    %175 = vmatprep.mubr.f32.mxu0 0.0
    %176 = vmatmul.mubr.f32.gmra.mxu0 %v82
    %v177 = vpop.f32.mrf.mxu0
    %v178 = vadd.f32 %v62, %v177
    %v179 = vpop.f32.mrf.mxu0
    %v180 = vadd.f32 %v66, %v179
    %181 = vmatprep.mubr.f32.mxu0 0.0
    %182 = vmatmul.mubr.f32.gmra.mxu0 %v85
    %v183 = vpop.f32.mrf.mxu0
    %v184 = vadd.f32 %v62, %v183
    %v185 = vpop.f32.mrf.mxu0
    %v186 = vadd.f32 %v66, %v185
    %187 = vmatprep.mubr.f32.mxu0 0.0
    %188 = vmatmul.mubr.f32.gmra.mxu0 %v88
    %v189 = vpop.f32.mrf.mxu0
    %v190 = vadd.f32 %v62, %v189
    %v191 = vpop.f32.mrf.mxu0
    %v192 = vadd.f32 %v66, %v191
    %193 = vmatprep.mubr.f32.mxu0 0.0
    %194 = vmatmul.mubr.f32.gmra.mxu0 %v91
    %v195 = vpop.f32.mrf.mxu0
    %v196 = vadd.f32 %v62, %v195
    %v197 = vpop.f32.mrf.mxu0
    %v198 = vadd.f32 %v66, %v197
    %199 = vmatprep.mubr.f32.mxu0 0.0
    %200 = vmatmul.mubr.f32.gmra.mxu0 %v94
    %v201 = vpop.f32.mrf.mxu0
    %v202 = vadd.f32 %v62, %v201
    %v203 = vpop.f32.mrf.mxu0
    %v204 = vadd.f32 %v66, %v203
    %205 = vmatprep.mubr.f32.mxu0 0.0
    %206 = vmatmul.mubr.f32.gmra.mxu0 %v97
    %v207 = vpop.f32.mrf.mxu0
    %v208 = vadd.f32 %v62, %v207
    %v209 = vpop.f32.mrf.mxu0
    %v210 = vadd.f32 %v66, %v209
    %211 = vdwg.mxu0
    %212 = vmatprep.subr.mxu0 0.0
    %213 = vmatpush1.msra.mxu0 0.0
    %214 = vmatprep.subr.mxu0 0.0
    %215 = vmatpush1.msra.mxu0 0.0
    %216 = vmatprep.subr.mxu0 0.0
    %217 = vmatpush1.msra.mxu0 0.0
    %218 = vmatprep.subr.mxu0 0.0
    %219 = vmatpush1.msra.mxu0 0.0
    %220 = vmatprep.subr.mxu0 0.0
    %221 = vmatpush1.msra.mxu0 0.0
    %222 = vmatprep.subr.mxu0 0.0
    %223 = vmatpush1.msra.mxu0 0.0
    %224 = vmatprep.subr.mxu0 0.0
    %225 = vmatpush1.msra.mxu0 0.0
    %226 = vmatprep.subr.mxu0 0.0
    %227 = vmatpush1.msra.mxu0 0.0
    %228 = vmatprep.subr.mxu0 0.0
    %229 = vmatpush1.msra.mxu0 0.0
    %230 = vmatprep.subr.mxu0 0.0
    %231 = vmatpush1.msra.mxu0 0.0
    %232 = vmatprep.subr.mxu0 0.0
    %233 = vmatpush1.msra.mxu0 0.0
    %234 = vmatprep.subr.mxu0 0.0
    %235 = vmatpush1.msra.mxu0 0.0
    %236 = vmatprep.subr.mxu0 0.0
    %237 = vmatpush1.msra.mxu0 %v56
    %238 = vmatprep.subr.mxu0 0.0
    %239 = vmatpush1.msra.mxu0 %v53
    %240 = vmatprep.subr.mxu0 0.0
    %241 = vmatpush1.msra.mxu0 %v50
    %242 = vmatprep.subr.mxu0 0.0
    %243 = vmatpush1.msra.mxu0 %v47
    %244 = vmatprep.subr.mxu0 0.0
    %245 = vmatpush2.msra.mxu0 0.0
    %246 = vmatprep.subr.mxu0 0.0
    %247 = vmatpush2.msra.mxu0 0.0
    %248 = vmatprep.subr.mxu0 0.0
    %249 = vmatpush2.msra.mxu0 0.0
    %250 = vmatprep.subr.mxu0 0.0
    %251 = vmatpush2.msra.mxu0 0.0
    %252 = vmatprep.subr.mxu0 0.0
    %253 = vmatpush2.msra.mxu0 0.0
    %254 = vmatprep.subr.mxu0 0.0
    %255 = vmatpush2.msra.mxu0 0.0
    %256 = vmatprep.subr.mxu0 0.0
    %257 = vmatpush2.msra.mxu0 0.0
    %258 = vmatprep.subr.mxu0 0.0
    %259 = vmatpush2.msra.mxu0 0.0
    %260 = vmatprep.subr.mxu0 0.0
    %261 = vmatpush2.msra.mxu0 0.0
    %262 = vmatprep.subr.mxu0 0.0
    %263 = vmatpush2.msra.mxu0 0.0
    %264 = vmatprep.subr.mxu0 0.0
    %265 = vmatpush2.msra.mxu0 0.0
    %266 = vmatprep.subr.mxu0 0.0
    %267 = vmatpush2.msra.mxu0 0.0
    %268 = vmatprep.subr.mxu0 0.0
    %269 = vmatpush2.msra.mxu0 0.0
    %270 = vmatprep.subr.mxu0 0.0
    %271 = vmatpush2.msra.mxu0 0.0
    %272 = vmatprep.subr.mxu0 0.0
    %273 = vmatpush2.msra.mxu0 0.0
    %274 = vmatprep.subr.mxu0 0.0
    %275 = vmatpush2.msra.mxu0 0.0
    %276 = vmatprep.mubr.f32.mxu0 0.0
    %277 = vmatmul.mubr.f32.gmra.mxu0 %v76
    %v278 = vpop.f32.mrf.mxu0
    %v279 = vadd.f32 %v70, %v278
    %v280 = vpop.f32.mrf.mxu0
    %281 = vmatprep.mubr.f32.mxu0 0.0
    %282 = vmatmul.mubr.f32.gmra.mxu0 %v79
    %v283 = vpop.f32.mrf.mxu0
    %v284 = vadd.f32 %v70, %v283
    %v285 = vpop.f32.mrf.mxu0
    %286 = vmatprep.mubr.f32.mxu0 0.0
    %287 = vmatmul.mubr.f32.gmra.mxu0 %v82
    %v288 = vpop.f32.mrf.mxu0
    %v289 = vadd.f32 %v70, %v288
    %v290 = vpop.f32.mrf.mxu0
    %291 = vmatprep.mubr.f32.mxu0 0.0
    %292 = vmatmul.mubr.f32.gmra.mxu0 %v85
    %v293 = vpop.f32.mrf.mxu0
    %v294 = vadd.f32 %v70, %v293
    %v295 = vpop.f32.mrf.mxu0
    %296 = vmatprep.mubr.f32.mxu0 0.0
    %297 = vmatmul.mubr.f32.gmra.mxu0 %v88
    %v298 = vpop.f32.mrf.mxu0
    %v299 = vadd.f32 %v70, %v298
    %v300 = vpop.f32.mrf.mxu0
    %301 = vmatprep.mubr.f32.mxu0 0.0
    %302 = vmatmul.mubr.f32.gmra.mxu0 %v91
    %v303 = vpop.f32.mrf.mxu0
    %v304 = vadd.f32 %v70, %v303
    %v305 = vpop.f32.mrf.mxu0
    %306 = vmatprep.mubr.f32.mxu0 0.0
    %307 = vmatmul.mubr.f32.gmra.mxu0 %v94
    %v308 = vpop.f32.mrf.mxu0
    %v309 = vadd.f32 %v70, %v308
    %v310 = vpop.f32.mrf.mxu0
    %311 = vmatprep.mubr.f32.mxu0 0.0
    %312 = vmatmul.mubr.f32.gmra.mxu0 %v97
    %v313 = vpop.f32.mrf.mxu0
    %v314 = vadd.f32 %v70, %v313
    %v315 = vpop.f32.mrf.mxu0
    %316 = vdwg.mxu0
    %v317 = vld [vmem:[%s1] sm:$0xff]
    %v318 = vld [vmem:[#allocation2] sm:$0xff]
    %v319 = vld [vmem:[#allocation2 + $0x8] sm:$0xff]
    %v320 = vld [vmem:[#allocation2 + $0x10] sm:$0xff]
    %v321 = vld [vmem:[#allocation2 + $0x18] sm:$0xff]
    %v322 = vld [vmem:[#allocation2 + $0x20] sm:$0xff]
    %v323 = vld [vmem:[#allocation2 + $0x28] sm:$0xff]
    %v324 = vld [vmem:[#allocation2 + $0x30] sm:$0xff]
    %v325 = vld [vmem:[#allocation2 + $0x38] sm:$0xff]
    %v326 = vld [vmem:[#allocation2 + $0x40] sm:$0xff]
    %v327 = vld [vmem:[#allocation2 + $0x48] sm:$0xff]
    %v328 = vld [vmem:[#allocation2 + $0x50] sm:$0xff]
    %v329 = vld [vmem:[#allocation2 + $0x58] sm:$0xff]
    %v330 = vld [vmem:[#allocation2 + $0x60] sm:$0xff]
    %v331 = vld [vmem:[#allocation2 + $0x68] sm:$0xff]
    %v332 = vld [vmem:[#allocation2 + $0x70] sm:$0xff]
    %v333 = vld [vmem:[#allocation2 + $0x78] sm:$0xff]
    %v334 = vld [vmem:[#allocation2 + $0x80] sm:$0xff]
    %v335 = vld [vmem:[#allocation2 + $0x88] sm:$0xff]
    %v336 = vld [vmem:[#allocation2 + $0x90] sm:$0xff]
    %v337 = vld [vmem:[#allocation2 + $0x98] sm:$0xff]
    %v338 = vld [vmem:[#allocation2 + $0xa0] sm:$0xff]
    %v339 = vld [vmem:[#allocation2 + $0xa8] sm:$0xff]
    %v340 = vld [vmem:[#allocation2 + $0xb0] sm:$0xff]
    %v341 = vld [vmem:[#allocation2 + $0xb8] sm:$0xff]
    %v342 = vld [vmem:[#allocation2 + $0xc0] sm:$0xff]
    %v343 = vld [vmem:[#allocation2 + $0xc8] sm:$0xff]
    %v344 = vld [vmem:[#allocation2 + $0xd0] sm:$0xff]
    %v345 = vld [vmem:[#allocation2 + $0xd8] sm:$0xff]
    %v346 = vld [vmem:[#allocation2 + $0xe0] sm:$0xff]
    %v347 = vld [vmem:[#allocation2 + $0xe8] sm:$0xff]
    %v348 = vld [vmem:[#allocation2 + $0xf0] sm:$0xff]
    %v349 = vld [vmem:[#allocation2 + $0xf8] sm:$0xff]
    %v350 = vld [vmem:[#allocation2 + $0x100] sm:$0xff]
    %v351 = vld [vmem:[#allocation2 + $0x108] sm:$0xff]
    %v352 = vld [vmem:[#allocation2 + $0x110] sm:$0xff]
    %v353 = vld [vmem:[#allocation2 + $0x118] sm:$0xff]
    %v354 = vld [vmem:[#allocation2 + $0x120] sm:$0xff]
    %v355 = vld [vmem:[#allocation2 + $0x128] sm:$0xff]
    %v356 = vld [vmem:[#allocation2 + $0x130] sm:$0xff]
    %v357 = vld [vmem:[#allocation2 + $0x138] sm:$0xff]
    %v358 = vld [vmem:[#allocation2 + $0x140] sm:$0xff]
    %v359 = vld [vmem:[#allocation2 + $0x148] sm:$0xff]
    %v360 = vld [vmem:[#allocation2 + $0x150] sm:$0xff]
    %v361 = vld [vmem:[#allocation2 + $0x158] sm:$0xff]
    %v362 = vld [vmem:[#allocation2 + $0x160] sm:$0xff]
    %v363 = vld [vmem:[#allocation2 + $0x168] sm:$0xff]
    %v364 = vld [vmem:[#allocation2 + $0x170] sm:$0xff]
    %v365 = vld [vmem:[#allocation2 + $0x178] sm:$0xff]
    %v366 = vld [vmem:[%s5] sm:$0x1]
    %v368 = vlaneseq
    %v369 = vshrl.u32 %v368, 7
    %v370 = vsub.s32 0, %v369
    %v371 = vrot.slane %v366, %v370
    %373 = vmatprep.subr.mxu0 %v364
    %374 = vmatpush1.msra.mxu0 %v363
    %375 = vmatprep.subr.mxu0 %v361
    %376 = vmatpush1.msra.mxu0 %v360
    %377 = vmatprep.subr.mxu0 %v358
    %378 = vmatpush1.msra.mxu0 %v357
    %379 = vmatprep.subr.mxu0 %v355
    %380 = vmatpush1.msra.mxu0 %v354
    %381 = vmatprep.subr.mxu0 %v352
    %382 = vmatpush1.msra.mxu0 %v351
    %383 = vmatprep.subr.mxu0 %v349
    %384 = vmatpush1.msra.mxu0 %v348
    %385 = vmatprep.subr.mxu0 %v346
    %386 = vmatpush1.msra.mxu0 %v345
    %387 = vmatprep.subr.mxu0 %v343
    %388 = vmatpush1.msra.mxu0 %v342
    %389 = vmatprep.subr.mxu0 %v340
    %390 = vmatpush1.msra.mxu0 %v339
    %391 = vmatprep.subr.mxu0 %v337
    %392 = vmatpush1.msra.mxu0 %v336
    %393 = vmatprep.subr.mxu0 %v334
    %394 = vmatpush1.msra.mxu0 %v333
    %395 = vmatprep.subr.mxu0 %v331
    %396 = vmatpush1.msra.mxu0 %v330
    %397 = vmatprep.subr.mxu0 %v328
    %398 = vmatpush1.msra.mxu0 %v327
    %399 = vmatprep.subr.mxu0 %v325
    %400 = vmatpush1.msra.mxu0 %v324
    %401 = vmatprep.subr.mxu0 %v322
    %402 = vmatpush1.msra.mxu0 %v321
    %403 = vmatprep.subr.mxu0 %v319
    %404 = vmatpush1.msra.mxu0 %v318
    %405 = vmatprep.subr.mxu0 0.0
    %406 = vmatpush2.msra.mxu0 0.0
    %407 = vmatprep.subr.mxu0 0.0
    %408 = vmatpush2.msra.mxu0 0.0
    %409 = vmatprep.subr.mxu0 0.0
    %410 = vmatpush2.msra.mxu0 0.0
    %411 = vmatprep.subr.mxu0 0.0
    %412 = vmatpush2.msra.mxu0 0.0
    %413 = vmatprep.subr.mxu0 0.0
    %414 = vmatpush2.msra.mxu0 0.0
    %415 = vmatprep.subr.mxu0 0.0
    %416 = vmatpush2.msra.mxu0 0.0
    %417 = vmatprep.subr.mxu0 0.0
    %418 = vmatpush2.msra.mxu0 0.0
    %419 = vmatprep.subr.mxu0 0.0
    %420 = vmatpush2.msra.mxu0 0.0
    %421 = vmatprep.subr.mxu0 0.0
    %422 = vmatpush2.msra.mxu0 0.0
    %423 = vmatprep.subr.mxu0 0.0
    %424 = vmatpush2.msra.mxu0 0.0
    %425 = vmatprep.subr.mxu0 0.0
    %426 = vmatpush2.msra.mxu0 0.0
    %427 = vmatprep.subr.mxu0 0.0
    %428 = vmatpush2.msra.mxu0 0.0
    %429 = vmatprep.subr.mxu0 0.0
    %430 = vmatpush2.msra.mxu0 0.0
    %431 = vmatprep.subr.mxu0 0.0
    %432 = vmatpush2.msra.mxu0 0.0
    %433 = vmatprep.subr.mxu0 0.0
    %434 = vmatpush2.msra.mxu0 0.0
    %435 = vmatprep.subr.mxu0 0.0
    %436 = vmatpush2.msra.mxu0 0.0
    %437 = vmatprep.mubr.f32.mxu0 0.0
    %438 = vmatmul.mubr.f32.gmra.mxu0 %v317
    %v439 = vpop.f32.mrf.mxu0
    %v440 = vadd.f32 0.0, %v439
    %v441 = vpop.f32.mrf.mxu0
    %v442 = vadd.f32 0.0, %v441
    %443 = vdwg.mxu0
    %444 = vmatprep.subr.mxu0 0.0
    %445 = vmatpush1.msra.mxu0 %v365
    %446 = vmatprep.subr.mxu0 0.0
    %447 = vmatpush1.msra.mxu0 %v362
    %448 = vmatprep.subr.mxu0 0.0
    %449 = vmatpush1.msra.mxu0 %v359
    %450 = vmatprep.subr.mxu0 0.0
    %451 = vmatpush1.msra.mxu0 %v356
    %452 = vmatprep.subr.mxu0 0.0
    %453 = vmatpush1.msra.mxu0 %v353
    %454 = vmatprep.subr.mxu0 0.0
    %455 = vmatpush1.msra.mxu0 %v350
    %456 = vmatprep.subr.mxu0 0.0
    %457 = vmatpush1.msra.mxu0 %v347
    %458 = vmatprep.subr.mxu0 0.0
    %459 = vmatpush1.msra.mxu0 %v344
    %460 = vmatprep.subr.mxu0 0.0
    %461 = vmatpush1.msra.mxu0 %v341
    %462 = vmatprep.subr.mxu0 0.0
    %463 = vmatpush1.msra.mxu0 %v338
    %464 = vmatprep.subr.mxu0 0.0
    %465 = vmatpush1.msra.mxu0 %v335
    %466 = vmatprep.subr.mxu0 0.0
    %467 = vmatpush1.msra.mxu0 %v332
    %468 = vmatprep.subr.mxu0 0.0
    %469 = vmatpush1.msra.mxu0 %v329
    %470 = vmatprep.subr.mxu0 0.0
    %471 = vmatpush1.msra.mxu0 %v326
    %472 = vmatprep.subr.mxu0 0.0
    %473 = vmatpush1.msra.mxu0 %v323
    %474 = vmatprep.subr.mxu0 0.0
    %475 = vmatpush1.msra.mxu0 %v320
    %476 = vmatprep.subr.mxu0 0.0
    %477 = vmatpush2.msra.mxu0 0.0
    %478 = vmatprep.subr.mxu0 0.0
    %479 = vmatpush2.msra.mxu0 0.0
    %480 = vmatprep.subr.mxu0 0.0
    %481 = vmatpush2.msra.mxu0 0.0
    %482 = vmatprep.subr.mxu0 0.0
    %483 = vmatpush2.msra.mxu0 0.0
    %484 = vmatprep.subr.mxu0 0.0
    %485 = vmatpush2.msra.mxu0 0.0
    %486 = vmatprep.subr.mxu0 0.0
    %487 = vmatpush2.msra.mxu0 0.0
    %488 = vmatprep.subr.mxu0 0.0
    %489 = vmatpush2.msra.mxu0 0.0
    %490 = vmatprep.subr.mxu0 0.0
    %491 = vmatpush2.msra.mxu0 0.0
    %492 = vmatprep.subr.mxu0 0.0
    %493 = vmatpush2.msra.mxu0 0.0
    %494 = vmatprep.subr.mxu0 0.0
    %495 = vmatpush2.msra.mxu0 0.0
    %496 = vmatprep.subr.mxu0 0.0
    %497 = vmatpush2.msra.mxu0 0.0
    %498 = vmatprep.subr.mxu0 0.0
    %499 = vmatpush2.msra.mxu0 0.0
    %500 = vmatprep.subr.mxu0 0.0
    %501 = vmatpush2.msra.mxu0 0.0
    %502 = vmatprep.subr.mxu0 0.0
    %503 = vmatpush2.msra.mxu0 0.0
    %504 = vmatprep.subr.mxu0 0.0
    %505 = vmatpush2.msra.mxu0 0.0
    %506 = vmatprep.subr.mxu0 0.0
    %507 = vmatpush2.msra.mxu0 0.0
    %508 = vmatprep.mubr.f32.mxu0 0.0
    %509 = vmatmul.mubr.f32.gmra.mxu0 %v317
    %v510 = vpop.f32.mrf.mxu0
    %v511 = vadd.f32 0.0, %v510
    %v512 = vpop.f32.mrf.mxu0
    %513 = vdwg.mxu0
    %v514 = vadd.f32 %v166, %v440
    %v515 = vxor.u32 %v514, 2147483648
    %v516 = vmul.f32 %v515, 1.442695
    %v517 = vpow.pop %v516
    %v518 = vadd.f32 %v517, 1.0
    %v519 = vrcp.pop %v518
    %v520 = vmul.f32 1.0, %v519
    %v521 = vadd.f32 %v442, %v371
    %v522 = vmul.f32 %v520, %v521
    %v523 = vadd.f32 %v168, %v522
    %v524 = vtanh.pop %v523
    %v525 = vadd.f32 %v279, %v511
    %v526 = vxor.u32 %v525, 2147483648
    %v527 = vmul.f32 %v526, 1.442695
    %v528 = vpow.pop %v527
    %v529 = vadd.f32 %v528, 1.0
    %v530 = vrcp.pop %v529
    %v531 = vmul.f32 1.0, %v530
    %v532 = vsub.f32 %v317, %v524
    %v533 = vmul.f32 %v531, %v532
    %v534 = vadd.f32 %v524, %v533
    %535 = vst [vmem:[%s6] sm:$0xff] %v534
    %536 = vmatprep.subr.mxu0 %v364
    %537 = vmatpush1.msra.mxu0 %v363
    %538 = vmatprep.subr.mxu0 %v361
    %539 = vmatpush1.msra.mxu0 %v360
    %540 = vmatprep.subr.mxu0 %v358
    %541 = vmatpush1.msra.mxu0 %v357
    %542 = vmatprep.subr.mxu0 %v355
    %543 = vmatpush1.msra.mxu0 %v354
    %544 = vmatprep.subr.mxu0 %v352
    %545 = vmatpush1.msra.mxu0 %v351
    %546 = vmatprep.subr.mxu0 %v349
    %547 = vmatpush1.msra.mxu0 %v348
    %548 = vmatprep.subr.mxu0 %v346
    %549 = vmatpush1.msra.mxu0 %v345
    %550 = vmatprep.subr.mxu0 %v343
    %551 = vmatpush1.msra.mxu0 %v342
    %552 = vmatprep.subr.mxu0 %v340
    %553 = vmatpush1.msra.mxu0 %v339
    %554 = vmatprep.subr.mxu0 %v337
    %555 = vmatpush1.msra.mxu0 %v336
    %556 = vmatprep.subr.mxu0 %v334
    %557 = vmatpush1.msra.mxu0 %v333
    %558 = vmatprep.subr.mxu0 %v331
    %559 = vmatpush1.msra.mxu0 %v330
    %560 = vmatprep.subr.mxu0 %v328
    %561 = vmatpush1.msra.mxu0 %v327
    %562 = vmatprep.subr.mxu0 %v325
    %563 = vmatpush1.msra.mxu0 %v324
    %564 = vmatprep.subr.mxu0 %v322
    %565 = vmatpush1.msra.mxu0 %v321
    %566 = vmatprep.subr.mxu0 %v319
    %567 = vmatpush1.msra.mxu0 %v318
    %568 = vmatprep.subr.mxu0 0.0
    %569 = vmatpush2.msra.mxu0 0.0
    %570 = vmatprep.subr.mxu0 0.0
    %571 = vmatpush2.msra.mxu0 0.0
    %572 = vmatprep.subr.mxu0 0.0
    %573 = vmatpush2.msra.mxu0 0.0
    %574 = vmatprep.subr.mxu0 0.0
    %575 = vmatpush2.msra.mxu0 0.0
    %576 = vmatprep.subr.mxu0 0.0
    %577 = vmatpush2.msra.mxu0 0.0
    %578 = vmatprep.subr.mxu0 0.0
    %579 = vmatpush2.msra.mxu0 0.0
    %580 = vmatprep.subr.mxu0 0.0
    %581 = vmatpush2.msra.mxu0 0.0
    %582 = vmatprep.subr.mxu0 0.0
    %583 = vmatpush2.msra.mxu0 0.0
    %584 = vmatprep.subr.mxu0 0.0
    %585 = vmatpush2.msra.mxu0 0.0
    %586 = vmatprep.subr.mxu0 0.0
    %587 = vmatpush2.msra.mxu0 0.0
    %588 = vmatprep.subr.mxu0 0.0
    %589 = vmatpush2.msra.mxu0 0.0
    %590 = vmatprep.subr.mxu0 0.0
    %591 = vmatpush2.msra.mxu0 0.0
    %592 = vmatprep.subr.mxu0 0.0
    %593 = vmatpush2.msra.mxu0 0.0
    %594 = vmatprep.subr.mxu0 0.0
    %595 = vmatpush2.msra.mxu0 0.0
    %596 = vmatprep.subr.mxu0 0.0
    %597 = vmatpush2.msra.mxu0 0.0
    %598 = vmatprep.subr.mxu0 0.0
    %599 = vmatpush2.msra.mxu0 0.0
    %600 = vmatprep.mubr.f32.mxu0 0.0
    %601 = vmatmul.mubr.f32.gmra.mxu0 %v534
    %v602 = vpop.f32.mrf.mxu0
    %v603 = vadd.f32 0.0, %v602
    %v604 = vpop.f32.mrf.mxu0
    %v605 = vadd.f32 0.0, %v604
    %606 = vdwg.mxu0
    %607 = vmatprep.subr.mxu0 0.0
    %608 = vmatpush1.msra.mxu0 %v365
    %609 = vmatprep.subr.mxu0 0.0
    %610 = vmatpush1.msra.mxu0 %v362
    %611 = vmatprep.subr.mxu0 0.0
    %612 = vmatpush1.msra.mxu0 %v359
    %613 = vmatprep.subr.mxu0 0.0
    %614 = vmatpush1.msra.mxu0 %v356
    %615 = vmatprep.subr.mxu0 0.0
    %616 = vmatpush1.msra.mxu0 %v353
    %617 = vmatprep.subr.mxu0 0.0
    %618 = vmatpush1.msra.mxu0 %v350
    %619 = vmatprep.subr.mxu0 0.0
    %620 = vmatpush1.msra.mxu0 %v347
    %621 = vmatprep.subr.mxu0 0.0
    %622 = vmatpush1.msra.mxu0 %v344
    %623 = vmatprep.subr.mxu0 0.0
    %624 = vmatpush1.msra.mxu0 %v341
    %625 = vmatprep.subr.mxu0 0.0
    %626 = vmatpush1.msra.mxu0 %v338
    %627 = vmatprep.subr.mxu0 0.0
    %628 = vmatpush1.msra.mxu0 %v335
    %629 = vmatprep.subr.mxu0 0.0
    %630 = vmatpush1.msra.mxu0 %v332
    %631 = vmatprep.subr.mxu0 0.0
    %632 = vmatpush1.msra.mxu0 %v329
    %633 = vmatprep.subr.mxu0 0.0
    %634 = vmatpush1.msra.mxu0 %v326
    %635 = vmatprep.subr.mxu0 0.0
    %636 = vmatpush1.msra.mxu0 %v323
    %637 = vmatprep.subr.mxu0 0.0
    %638 = vmatpush1.msra.mxu0 %v320
    %639 = vmatprep.subr.mxu0 0.0
    %640 = vmatpush2.msra.mxu0 0.0
    %641 = vmatprep.subr.mxu0 0.0
    %642 = vmatpush2.msra.mxu0 0.0
    %643 = vmatprep.subr.mxu0 0.0
    %644 = vmatpush2.msra.mxu0 0.0
    %645 = vmatprep.subr.mxu0 0.0
    %646 = vmatpush2.msra.mxu0 0.0
    %647 = vmatprep.subr.mxu0 0.0
    %648 = vmatpush2.msra.mxu0 0.0
    %649 = vmatprep.subr.mxu0 0.0
    %650 = vmatpush2.msra.mxu0 0.0
    %651 = vmatprep.subr.mxu0 0.0
    %652 = vmatpush2.msra.mxu0 0.0
    %653 = vmatprep.subr.mxu0 0.0
    %654 = vmatpush2.msra.mxu0 0.0
    %655 = vmatprep.subr.mxu0 0.0
    %656 = vmatpush2.msra.mxu0 0.0
    %657 = vmatprep.subr.mxu0 0.0
    %658 = vmatpush2.msra.mxu0 0.0
    %659 = vmatprep.subr.mxu0 0.0
    %660 = vmatpush2.msra.mxu0 0.0
    %661 = vmatprep.subr.mxu0 0.0
    %662 = vmatpush2.msra.mxu0 0.0
    %663 = vmatprep.subr.mxu0 0.0
    %664 = vmatpush2.msra.mxu0 0.0
    %665 = vmatprep.subr.mxu0 0.0
    %666 = vmatpush2.msra.mxu0 0.0
    %667 = vmatprep.subr.mxu0 0.0
    %668 = vmatpush2.msra.mxu0 0.0
    %669 = vmatprep.subr.mxu0 0.0
    %670 = vmatpush2.msra.mxu0 0.0
    %671 = vmatprep.mubr.f32.mxu0 0.0
    %672 = vmatmul.mubr.f32.gmra.mxu0 %v534
    %v673 = vpop.f32.mrf.mxu0
    %v674 = vadd.f32 0.0, %v673
    %v675 = vpop.f32.mrf.mxu0
    %676 = vdwg.mxu0
    %v677 = vadd.f32 %v172, %v603
    %v678 = vxor.u32 %v677, 2147483648
    %v679 = vmul.f32 %v678, 1.442695
    %v680 = vpow.pop %v679
    %v681 = vadd.f32 %v680, 1.0
    %v682 = vrcp.pop %v681
    %v683 = vmul.f32 1.0, %v682
    %v684 = vadd.f32 %v605, %v371
    %v685 = vmul.f32 %v683, %v684
    %v686 = vadd.f32 %v174, %v685
    %v687 = vtanh.pop %v686
    %v688 = vadd.f32 %v284, %v674
    %v689 = vxor.u32 %v688, 2147483648
    %v690 = vmul.f32 %v689, 1.442695
    %v691 = vpow.pop %v690
    %v692 = vadd.f32 %v691, 1.0
    %v693 = vrcp.pop %v692
    %v694 = vmul.f32 1.0, %v693
    %v695 = vsub.f32 %v534, %v687
    %v696 = vmul.f32 %v694, %v695
    %v697 = vadd.f32 %v687, %v696
    %698 = vst [vmem:[%s6 + $0x8] sm:$0xff] %v697
    %699 = vmatprep.subr.mxu0 %v364
    %700 = vmatpush1.msra.mxu0 %v363
    %701 = vmatprep.subr.mxu0 %v361
    %702 = vmatpush1.msra.mxu0 %v360
    %703 = vmatprep.subr.mxu0 %v358
    %704 = vmatpush1.msra.mxu0 %v357
    %705 = vmatprep.subr.mxu0 %v355
    %706 = vmatpush1.msra.mxu0 %v354
    %707 = vmatprep.subr.mxu0 %v352
    %708 = vmatpush1.msra.mxu0 %v351
    %709 = vmatprep.subr.mxu0 %v349
    %710 = vmatpush1.msra.mxu0 %v348
    %711 = vmatprep.subr.mxu0 %v346
    %712 = vmatpush1.msra.mxu0 %v345
    %713 = vmatprep.subr.mxu0 %v343
    %714 = vmatpush1.msra.mxu0 %v342
    %715 = vmatprep.subr.mxu0 %v340
    %716 = vmatpush1.msra.mxu0 %v339
    %717 = vmatprep.subr.mxu0 %v337
    %718 = vmatpush1.msra.mxu0 %v336
    %719 = vmatprep.subr.mxu0 %v334
    %720 = vmatpush1.msra.mxu0 %v333
    %721 = vmatprep.subr.mxu0 %v331
    %722 = vmatpush1.msra.mxu0 %v330
    %723 = vmatprep.subr.mxu0 %v328
    %724 = vmatpush1.msra.mxu0 %v327
    %725 = vmatprep.subr.mxu0 %v325
    %726 = vmatpush1.msra.mxu0 %v324
    %727 = vmatprep.subr.mxu0 %v322
    %728 = vmatpush1.msra.mxu0 %v321
    %729 = vmatprep.subr.mxu0 %v319
    %730 = vmatpush1.msra.mxu0 %v318
    %731 = vmatprep.subr.mxu0 0.0
    %732 = vmatpush2.msra.mxu0 0.0
    %733 = vmatprep.subr.mxu0 0.0
    %734 = vmatpush2.msra.mxu0 0.0
    %735 = vmatprep.subr.mxu0 0.0
    %736 = vmatpush2.msra.mxu0 0.0
    %737 = vmatprep.subr.mxu0 0.0
    %738 = vmatpush2.msra.mxu0 0.0
    %739 = vmatprep.subr.mxu0 0.0
    %740 = vmatpush2.msra.mxu0 0.0
    %741 = vmatprep.subr.mxu0 0.0
    %742 = vmatpush2.msra.mxu0 0.0
    %743 = vmatprep.subr.mxu0 0.0
    %744 = vmatpush2.msra.mxu0 0.0
    %745 = vmatprep.subr.mxu0 0.0
    %746 = vmatpush2.msra.mxu0 0.0
    %747 = vmatprep.subr.mxu0 0.0
    %748 = vmatpush2.msra.mxu0 0.0
    %749 = vmatprep.subr.mxu0 0.0
    %750 = vmatpush2.msra.mxu0 0.0
    %751 = vmatprep.subr.mxu0 0.0
    %752 = vmatpush2.msra.mxu0 0.0
    %753 = vmatprep.subr.mxu0 0.0
    %754 = vmatpush2.msra.mxu0 0.0
    %755 = vmatprep.subr.mxu0 0.0
    %756 = vmatpush2.msra.mxu0 0.0
    %757 = vmatprep.subr.mxu0 0.0
    %758 = vmatpush2.msra.mxu0 0.0
    %759 = vmatprep.subr.mxu0 0.0
    %760 = vmatpush2.msra.mxu0 0.0
    %761 = vmatprep.subr.mxu0 0.0
    %762 = vmatpush2.msra.mxu0 0.0
    %763 = vmatprep.mubr.f32.mxu0 0.0
    %764 = vmatmul.mubr.f32.gmra.mxu0 %v697
    %v765 = vpop.f32.mrf.mxu0
    %v766 = vadd.f32 0.0, %v765
    %v767 = vpop.f32.mrf.mxu0
    %v768 = vadd.f32 0.0, %v767
    %769 = vdwg.mxu0
    %770 = vmatprep.subr.mxu0 0.0
    %771 = vmatpush1.msra.mxu0 %v365
    %772 = vmatprep.subr.mxu0 0.0
    %773 = vmatpush1.msra.mxu0 %v362
    %774 = vmatprep.subr.mxu0 0.0
    %775 = vmatpush1.msra.mxu0 %v359
    %776 = vmatprep.subr.mxu0 0.0
    %777 = vmatpush1.msra.mxu0 %v356
    %778 = vmatprep.subr.mxu0 0.0
    %779 = vmatpush1.msra.mxu0 %v353
    %780 = vmatprep.subr.mxu0 0.0
    %781 = vmatpush1.msra.mxu0 %v350
    %782 = vmatprep.subr.mxu0 0.0
    %783 = vmatpush1.msra.mxu0 %v347
    %784 = vmatprep.subr.mxu0 0.0
    %785 = vmatpush1.msra.mxu0 %v344
    %786 = vmatprep.subr.mxu0 0.0
    %787 = vmatpush1.msra.mxu0 %v341
    %788 = vmatprep.subr.mxu0 0.0
    %789 = vmatpush1.msra.mxu0 %v338
    %790 = vmatprep.subr.mxu0 0.0
    %791 = vmatpush1.msra.mxu0 %v335
    %792 = vmatprep.subr.mxu0 0.0
    %793 = vmatpush1.msra.mxu0 %v332
    %794 = vmatprep.subr.mxu0 0.0
    %795 = vmatpush1.msra.mxu0 %v329
    %796 = vmatprep.subr.mxu0 0.0
    %797 = vmatpush1.msra.mxu0 %v326
    %798 = vmatprep.subr.mxu0 0.0
    %799 = vmatpush1.msra.mxu0 %v323
    %800 = vmatprep.subr.mxu0 0.0
    %801 = vmatpush1.msra.mxu0 %v320
    %802 = vmatprep.subr.mxu0 0.0
    %803 = vmatpush2.msra.mxu0 0.0
    %804 = vmatprep.subr.mxu0 0.0
    %805 = vmatpush2.msra.mxu0 0.0
    %806 = vmatprep.subr.mxu0 0.0
    %807 = vmatpush2.msra.mxu0 0.0
    %808 = vmatprep.subr.mxu0 0.0
    %809 = vmatpush2.msra.mxu0 0.0
    %810 = vmatprep.subr.mxu0 0.0
    %811 = vmatpush2.msra.mxu0 0.0
    %812 = vmatprep.subr.mxu0 0.0
    %813 = vmatpush2.msra.mxu0 0.0
    %814 = vmatprep.subr.mxu0 0.0
    %815 = vmatpush2.msra.mxu0 0.0
    %816 = vmatprep.subr.mxu0 0.0
    %817 = vmatpush2.msra.mxu0 0.0
    %818 = vmatprep.subr.mxu0 0.0
    %819 = vmatpush2.msra.mxu0 0.0
    %820 = vmatprep.subr.mxu0 0.0
    %821 = vmatpush2.msra.mxu0 0.0
    %822 = vmatprep.subr.mxu0 0.0
    %823 = vmatpush2.msra.mxu0 0.0
    %824 = vmatprep.subr.mxu0 0.0
    %825 = vmatpush2.msra.mxu0 0.0
    %826 = vmatprep.subr.mxu0 0.0
    %827 = vmatpush2.msra.mxu0 0.0
    %828 = vmatprep.subr.mxu0 0.0
    %829 = vmatpush2.msra.mxu0 0.0
    %830 = vmatprep.subr.mxu0 0.0
    %831 = vmatpush2.msra.mxu0 0.0
    %832 = vmatprep.subr.mxu0 0.0
    %833 = vmatpush2.msra.mxu0 0.0
    %834 = vmatprep.mubr.f32.mxu0 0.0
    %835 = vmatmul.mubr.f32.gmra.mxu0 %v697
    %v836 = vpop.f32.mrf.mxu0
    %v837 = vadd.f32 0.0, %v836
    %v838 = vpop.f32.mrf.mxu0
    %839 = vdwg.mxu0
    %v840 = vadd.f32 %v178, %v766
    %v841 = vxor.u32 %v840, 2147483648
    %v842 = vmul.f32 %v841, 1.442695
    %v843 = vpow.pop %v842
    %v844 = vadd.f32 %v843, 1.0
    %v845 = vrcp.pop %v844
    %v846 = vmul.f32 1.0, %v845
    %v847 = vadd.f32 %v768, %v371
    %v848 = vmul.f32 %v846, %v847
    %v849 = vadd.f32 %v180, %v848
    %v850 = vtanh.pop %v849
    %v851 = vadd.f32 %v289, %v837
    %v852 = vxor.u32 %v851, 2147483648
    %v853 = vmul.f32 %v852, 1.442695
    %v854 = vpow.pop %v853
    %v855 = vadd.f32 %v854, 1.0
    %v856 = vrcp.pop %v855
    %v857 = vmul.f32 1.0, %v856
    %v858 = vsub.f32 %v697, %v850
    %v859 = vmul.f32 %v857, %v858
    %v860 = vadd.f32 %v850, %v859
    %861 = vst [vmem:[%s6 + $0x10] sm:$0xff] %v860
    %862 = vmatprep.subr.mxu0 %v364
    %863 = vmatpush1.msra.mxu0 %v363
    %864 = vmatprep.subr.mxu0 %v361
    %865 = vmatpush1.msra.mxu0 %v360
    %866 = vmatprep.subr.mxu0 %v358
    %867 = vmatpush1.msra.mxu0 %v357
    %868 = vmatprep.subr.mxu0 %v355
    %869 = vmatpush1.msra.mxu0 %v354
    %870 = vmatprep.subr.mxu0 %v352
    %871 = vmatpush1.msra.mxu0 %v351
    %872 = vmatprep.subr.mxu0 %v349
    %873 = vmatpush1.msra.mxu0 %v348
    %874 = vmatprep.subr.mxu0 %v346
    %875 = vmatpush1.msra.mxu0 %v345
    %876 = vmatprep.subr.mxu0 %v343
    %877 = vmatpush1.msra.mxu0 %v342
    %878 = vmatprep.subr.mxu0 %v340
    %879 = vmatpush1.msra.mxu0 %v339
    %880 = vmatprep.subr.mxu0 %v337
    %881 = vmatpush1.msra.mxu0 %v336
    %882 = vmatprep.subr.mxu0 %v334
    %883 = vmatpush1.msra.mxu0 %v333
    %884 = vmatprep.subr.mxu0 %v331
    %885 = vmatpush1.msra.mxu0 %v330
    %886 = vmatprep.subr.mxu0 %v328
    %887 = vmatpush1.msra.mxu0 %v327
    %888 = vmatprep.subr.mxu0 %v325
    %889 = vmatpush1.msra.mxu0 %v324
    %890 = vmatprep.subr.mxu0 %v322
    %891 = vmatpush1.msra.mxu0 %v321
    %892 = vmatprep.subr.mxu0 %v319
    %893 = vmatpush1.msra.mxu0 %v318
    %894 = vmatprep.subr.mxu0 0.0
    %895 = vmatpush2.msra.mxu0 0.0
    %896 = vmatprep.subr.mxu0 0.0
    %897 = vmatpush2.msra.mxu0 0.0
    %898 = vmatprep.subr.mxu0 0.0
    %899 = vmatpush2.msra.mxu0 0.0
    %900 = vmatprep.subr.mxu0 0.0
    %901 = vmatpush2.msra.mxu0 0.0
    %902 = vmatprep.subr.mxu0 0.0
    %903 = vmatpush2.msra.mxu0 0.0
    %904 = vmatprep.subr.mxu0 0.0
    %905 = vmatpush2.msra.mxu0 0.0
    %906 = vmatprep.subr.mxu0 0.0
    %907 = vmatpush2.msra.mxu0 0.0
    %908 = vmatprep.subr.mxu0 0.0
    %909 = vmatpush2.msra.mxu0 0.0
    %910 = vmatprep.subr.mxu0 0.0
    %911 = vmatpush2.msra.mxu0 0.0
    %912 = vmatprep.subr.mxu0 0.0
    %913 = vmatpush2.msra.mxu0 0.0
    %914 = vmatprep.subr.mxu0 0.0
    %915 = vmatpush2.msra.mxu0 0.0
    %916 = vmatprep.subr.mxu0 0.0
    %917 = vmatpush2.msra.mxu0 0.0
    %918 = vmatprep.subr.mxu0 0.0
    %919 = vmatpush2.msra.mxu0 0.0
    %920 = vmatprep.subr.mxu0 0.0
    %921 = vmatpush2.msra.mxu0 0.0
    %922 = vmatprep.subr.mxu0 0.0
    %923 = vmatpush2.msra.mxu0 0.0
    %924 = vmatprep.subr.mxu0 0.0
    %925 = vmatpush2.msra.mxu0 0.0
    %926 = vmatprep.mubr.f32.mxu0 0.0
    %927 = vmatmul.mubr.f32.gmra.mxu0 %v860
    %v928 = vpop.f32.mrf.mxu0
    %v929 = vadd.f32 0.0, %v928
    %v930 = vpop.f32.mrf.mxu0
    %v931 = vadd.f32 0.0, %v930
    %932 = vdwg.mxu0
    %933 = vmatprep.subr.mxu0 0.0
    %934 = vmatpush1.msra.mxu0 %v365
    %935 = vmatprep.subr.mxu0 0.0
    %936 = vmatpush1.msra.mxu0 %v362
    %937 = vmatprep.subr.mxu0 0.0
    %938 = vmatpush1.msra.mxu0 %v359
    %939 = vmatprep.subr.mxu0 0.0
    %940 = vmatpush1.msra.mxu0 %v356
    %941 = vmatprep.subr.mxu0 0.0
    %942 = vmatpush1.msra.mxu0 %v353
    %943 = vmatprep.subr.mxu0 0.0
    %944 = vmatpush1.msra.mxu0 %v350
    %945 = vmatprep.subr.mxu0 0.0
    %946 = vmatpush1.msra.mxu0 %v347
    %947 = vmatprep.subr.mxu0 0.0
    %948 = vmatpush1.msra.mxu0 %v344
    %949 = vmatprep.subr.mxu0 0.0
    %950 = vmatpush1.msra.mxu0 %v341
    %951 = vmatprep.subr.mxu0 0.0
    %952 = vmatpush1.msra.mxu0 %v338
    %953 = vmatprep.subr.mxu0 0.0
    %954 = vmatpush1.msra.mxu0 %v335
    %955 = vmatprep.subr.mxu0 0.0
    %956 = vmatpush1.msra.mxu0 %v332
    %957 = vmatprep.subr.mxu0 0.0
    %958 = vmatpush1.msra.mxu0 %v329
    %959 = vmatprep.subr.mxu0 0.0
    %960 = vmatpush1.msra.mxu0 %v326
    %961 = vmatprep.subr.mxu0 0.0
    %962 = vmatpush1.msra.mxu0 %v323
    %963 = vmatprep.subr.mxu0 0.0
    %964 = vmatpush1.msra.mxu0 %v320
    %965 = vmatprep.subr.mxu0 0.0
    %966 = vmatpush2.msra.mxu0 0.0
    %967 = vmatprep.subr.mxu0 0.0
    %968 = vmatpush2.msra.mxu0 0.0
    %969 = vmatprep.subr.mxu0 0.0
    %970 = vmatpush2.msra.mxu0 0.0
    %971 = vmatprep.subr.mxu0 0.0
    %972 = vmatpush2.msra.mxu0 0.0
    %973 = vmatprep.subr.mxu0 0.0
    %974 = vmatpush2.msra.mxu0 0.0
    %975 = vmatprep.subr.mxu0 0.0
    %976 = vmatpush2.msra.mxu0 0.0
    %977 = vmatprep.subr.mxu0 0.0
    %978 = vmatpush2.msra.mxu0 0.0
    %979 = vmatprep.subr.mxu0 0.0
    %980 = vmatpush2.msra.mxu0 0.0
    %981 = vmatprep.subr.mxu0 0.0
    %982 = vmatpush2.msra.mxu0 0.0
    %983 = vmatprep.subr.mxu0 0.0
    %984 = vmatpush2.msra.mxu0 0.0
    %985 = vmatprep.subr.mxu0 0.0
    %986 = vmatpush2.msra.mxu0 0.0
    %987 = vmatprep.subr.mxu0 0.0
    %988 = vmatpush2.msra.mxu0 0.0
    %989 = vmatprep.subr.mxu0 0.0
    %990 = vmatpush2.msra.mxu0 0.0
    %991 = vmatprep.subr.mxu0 0.0
    %992 = vmatpush2.msra.mxu0 0.0
    %993 = vmatprep.subr.mxu0 0.0
    %994 = vmatpush2.msra.mxu0 0.0
    %995 = vmatprep.subr.mxu0 0.0
    %996 = vmatpush2.msra.mxu0 0.0
    %997 = vmatprep.mubr.f32.mxu0 0.0
    %998 = vmatmul.mubr.f32.gmra.mxu0 %v860
    %v999 = vpop.f32.mrf.mxu0
    %v1000 = vadd.f32 0.0, %v999
    %v1001 = vpop.f32.mrf.mxu0
    %1002 = vdwg.mxu0
    %v1003 = vadd.f32 %v184, %v929
    %v1004 = vxor.u32 %v1003, 2147483648
    %v1005 = vmul.f32 %v1004, 1.442695
    %v1006 = vpow.pop %v1005
    %v1007 = vadd.f32 %v1006, 1.0
    %v1008 = vrcp.pop %v1007
    %v1009 = vmul.f32 1.0, %v1008
    %v1010 = vadd.f32 %v931, %v371
    %v1011 = vmul.f32 %v1009, %v1010
    %v1012 = vadd.f32 %v186, %v1011
    %v1013 = vtanh.pop %v1012
    %v1014 = vadd.f32 %v294, %v1000
    %v1015 = vxor.u32 %v1014, 2147483648
    %v1016 = vmul.f32 %v1015, 1.442695
    %v1017 = vpow.pop %v1016
    %v1018 = vadd.f32 %v1017, 1.0
    %v1019 = vrcp.pop %v1018
    %v1020 = vmul.f32 1.0, %v1019
    %v1021 = vsub.f32 %v860, %v1013
    %v1022 = vmul.f32 %v1020, %v1021
    %v1023 = vadd.f32 %v1013, %v1022
    %1024 = vst [vmem:[%s6 + $0x18] sm:$0xff] %v1023
    %1025 = vmatprep.subr.mxu0 %v364
    %1026 = vmatpush1.msra.mxu0 %v363
    %1027 = vmatprep.subr.mxu0 %v361
    %1028 = vmatpush1.msra.mxu0 %v360
    %1029 = vmatprep.subr.mxu0 %v358
    %1030 = vmatpush1.msra.mxu0 %v357
    %1031 = vmatprep.subr.mxu0 %v355
    %1032 = vmatpush1.msra.mxu0 %v354
    %1033 = vmatprep.subr.mxu0 %v352
    %1034 = vmatpush1.msra.mxu0 %v351
    %1035 = vmatprep.subr.mxu0 %v349
    %1036 = vmatpush1.msra.mxu0 %v348
    %1037 = vmatprep.subr.mxu0 %v346
    %1038 = vmatpush1.msra.mxu0 %v345
    %1039 = vmatprep.subr.mxu0 %v343
    %1040 = vmatpush1.msra.mxu0 %v342
    %1041 = vmatprep.subr.mxu0 %v340
    %1042 = vmatpush1.msra.mxu0 %v339
    %1043 = vmatprep.subr.mxu0 %v337
    %1044 = vmatpush1.msra.mxu0 %v336
    %1045 = vmatprep.subr.mxu0 %v334
    %1046 = vmatpush1.msra.mxu0 %v333
    %1047 = vmatprep.subr.mxu0 %v331
    %1048 = vmatpush1.msra.mxu0 %v330
    %1049 = vmatprep.subr.mxu0 %v328
    %1050 = vmatpush1.msra.mxu0 %v327
    %1051 = vmatprep.subr.mxu0 %v325
    %1052 = vmatpush1.msra.mxu0 %v324
    %1053 = vmatprep.subr.mxu0 %v322
    %1054 = vmatpush1.msra.mxu0 %v321
    %1055 = vmatprep.subr.mxu0 %v319
    %1056 = vmatpush1.msra.mxu0 %v318
    %1057 = vmatprep.subr.mxu0 0.0
    %1058 = vmatpush2.msra.mxu0 0.0
    %1059 = vmatprep.subr.mxu0 0.0
    %1060 = vmatpush2.msra.mxu0 0.0
    %1061 = vmatprep.subr.mxu0 0.0
    %1062 = vmatpush2.msra.mxu0 0.0
    %1063 = vmatprep.subr.mxu0 0.0
    %1064 = vmatpush2.msra.mxu0 0.0
    %1065 = vmatprep.subr.mxu0 0.0
    %1066 = vmatpush2.msra.mxu0 0.0
    %1067 = vmatprep.subr.mxu0 0.0
    %1068 = vmatpush2.msra.mxu0 0.0
    %1069 = vmatprep.subr.mxu0 0.0
    %1070 = vmatpush2.msra.mxu0 0.0
    %1071 = vmatprep.subr.mxu0 0.0
    %1072 = vmatpush2.msra.mxu0 0.0
    %1073 = vmatprep.subr.mxu0 0.0
    %1074 = vmatpush2.msra.mxu0 0.0
    %1075 = vmatprep.subr.mxu0 0.0
    %1076 = vmatpush2.msra.mxu0 0.0
    %1077 = vmatprep.subr.mxu0 0.0
    %1078 = vmatpush2.msra.mxu0 0.0
    %1079 = vmatprep.subr.mxu0 0.0
    %1080 = vmatpush2.msra.mxu0 0.0
    %1081 = vmatprep.subr.mxu0 0.0
    %1082 = vmatpush2.msra.mxu0 0.0
    %1083 = vmatprep.subr.mxu0 0.0
    %1084 = vmatpush2.msra.mxu0 0.0
    %1085 = vmatprep.subr.mxu0 0.0
    %1086 = vmatpush2.msra.mxu0 0.0
    %1087 = vmatprep.subr.mxu0 0.0
    %1088 = vmatpush2.msra.mxu0 0.0
    %1089 = vmatprep.mubr.f32.mxu0 0.0
    %1090 = vmatmul.mubr.f32.gmra.mxu0 %v1023
    %v1091 = vpop.f32.mrf.mxu0
    %v1092 = vadd.f32 0.0, %v1091
    %v1093 = vpop.f32.mrf.mxu0
    %v1094 = vadd.f32 0.0, %v1093
    %1095 = vdwg.mxu0
    %1096 = vmatprep.subr.mxu0 0.0
    %1097 = vmatpush1.msra.mxu0 %v365
    %1098 = vmatprep.subr.mxu0 0.0
    %1099 = vmatpush1.msra.mxu0 %v362
    %1100 = vmatprep.subr.mxu0 0.0
    %1101 = vmatpush1.msra.mxu0 %v359
    %1102 = vmatprep.subr.mxu0 0.0
    %1103 = vmatpush1.msra.mxu0 %v356
    %1104 = vmatprep.subr.mxu0 0.0
    %1105 = vmatpush1.msra.mxu0 %v353
    %1106 = vmatprep.subr.mxu0 0.0
    %1107 = vmatpush1.msra.mxu0 %v350
    %1108 = vmatprep.subr.mxu0 0.0
    %1109 = vmatpush1.msra.mxu0 %v347
    %1110 = vmatprep.subr.mxu0 0.0
    %1111 = vmatpush1.msra.mxu0 %v344
    %1112 = vmatprep.subr.mxu0 0.0
    %1113 = vmatpush1.msra.mxu0 %v341
    %1114 = vmatprep.subr.mxu0 0.0
    %1115 = vmatpush1.msra.mxu0 %v338
    %1116 = vmatprep.subr.mxu0 0.0
    %1117 = vmatpush1.msra.mxu0 %v335
    %1118 = vmatprep.subr.mxu0 0.0
    %1119 = vmatpush1.msra.mxu0 %v332
    %1120 = vmatprep.subr.mxu0 0.0
    %1121 = vmatpush1.msra.mxu0 %v329
    %1122 = vmatprep.subr.mxu0 0.0
    %1123 = vmatpush1.msra.mxu0 %v326
    %1124 = vmatprep.subr.mxu0 0.0
    %1125 = vmatpush1.msra.mxu0 %v323
    %1126 = vmatprep.subr.mxu0 0.0
    %1127 = vmatpush1.msra.mxu0 %v320
    %1128 = vmatprep.subr.mxu0 0.0
    %1129 = vmatpush2.msra.mxu0 0.0
    %1130 = vmatprep.subr.mxu0 0.0
    %1131 = vmatpush2.msra.mxu0 0.0
    %1132 = vmatprep.subr.mxu0 0.0
    %1133 = vmatpush2.msra.mxu0 0.0
    %1134 = vmatprep.subr.mxu0 0.0
    %1135 = vmatpush2.msra.mxu0 0.0
    %1136 = vmatprep.subr.mxu0 0.0
    %1137 = vmatpush2.msra.mxu0 0.0
    %1138 = vmatprep.subr.mxu0 0.0
    %1139 = vmatpush2.msra.mxu0 0.0
    %1140 = vmatprep.subr.mxu0 0.0
    %1141 = vmatpush2.msra.mxu0 0.0
    %1142 = vmatprep.subr.mxu0 0.0
    %1143 = vmatpush2.msra.mxu0 0.0
    %1144 = vmatprep.subr.mxu0 0.0
    %1145 = vmatpush2.msra.mxu0 0.0
    %1146 = vmatprep.subr.mxu0 0.0
    %1147 = vmatpush2.msra.mxu0 0.0
    %1148 = vmatprep.subr.mxu0 0.0
    %1149 = vmatpush2.msra.mxu0 0.0
    %1150 = vmatprep.subr.mxu0 0.0
    %1151 = vmatpush2.msra.mxu0 0.0
    %1152 = vmatprep.subr.mxu0 0.0
    %1153 = vmatpush2.msra.mxu0 0.0
    %1154 = vmatprep.subr.mxu0 0.0
    %1155 = vmatpush2.msra.mxu0 0.0
    %1156 = vmatprep.subr.mxu0 0.0
    %1157 = vmatpush2.msra.mxu0 0.0
    %1158 = vmatprep.subr.mxu0 0.0
    %1159 = vmatpush2.msra.mxu0 0.0
    %1160 = vmatprep.mubr.f32.mxu0 0.0
    %1161 = vmatmul.mubr.f32.gmra.mxu0 %v1023
    %v1162 = vpop.f32.mrf.mxu0
    %v1163 = vadd.f32 0.0, %v1162
    %v1164 = vpop.f32.mrf.mxu0
    %1165 = vdwg.mxu0
    %v1166 = vadd.f32 %v190, %v1092
    %v1167 = vxor.u32 %v1166, 2147483648
    %v1168 = vmul.f32 %v1167, 1.442695
    %v1169 = vpow.pop %v1168
    %v1170 = vadd.f32 %v1169, 1.0
    %v1171 = vrcp.pop %v1170
    %v1172 = vmul.f32 1.0, %v1171
    %v1173 = vadd.f32 %v1094, %v371
    %v1174 = vmul.f32 %v1172, %v1173
    %v1175 = vadd.f32 %v192, %v1174
    %v1176 = vtanh.pop %v1175
    %v1177 = vadd.f32 %v299, %v1163
    %v1178 = vxor.u32 %v1177, 2147483648
    %v1179 = vmul.f32 %v1178, 1.442695
    %v1180 = vpow.pop %v1179
    %v1181 = vadd.f32 %v1180, 1.0
    %v1182 = vrcp.pop %v1181
    %v1183 = vmul.f32 1.0, %v1182
    %v1184 = vsub.f32 %v1023, %v1176
    %v1185 = vmul.f32 %v1183, %v1184
    %v1186 = vadd.f32 %v1176, %v1185
    %1187 = vst [vmem:[%s6 + $0x20] sm:$0xff] %v1186
    %1188 = vmatprep.subr.mxu0 %v364
    %1189 = vmatpush1.msra.mxu0 %v363
    %1190 = vmatprep.subr.mxu0 %v361
    %1191 = vmatpush1.msra.mxu0 %v360
    %1192 = vmatprep.subr.mxu0 %v358
    %1193 = vmatpush1.msra.mxu0 %v357
    %1194 = vmatprep.subr.mxu0 %v355
    %1195 = vmatpush1.msra.mxu0 %v354
    %1196 = vmatprep.subr.mxu0 %v352
    %1197 = vmatpush1.msra.mxu0 %v351
    %1198 = vmatprep.subr.mxu0 %v349
    %1199 = vmatpush1.msra.mxu0 %v348
    %1200 = vmatprep.subr.mxu0 %v346
    %1201 = vmatpush1.msra.mxu0 %v345
    %1202 = vmatprep.subr.mxu0 %v343
    %1203 = vmatpush1.msra.mxu0 %v342
    %1204 = vmatprep.subr.mxu0 %v340
    %1205 = vmatpush1.msra.mxu0 %v339
    %1206 = vmatprep.subr.mxu0 %v337
    %1207 = vmatpush1.msra.mxu0 %v336
    %1208 = vmatprep.subr.mxu0 %v334
    %1209 = vmatpush1.msra.mxu0 %v333
    %1210 = vmatprep.subr.mxu0 %v331
    %1211 = vmatpush1.msra.mxu0 %v330
    %1212 = vmatprep.subr.mxu0 %v328
    %1213 = vmatpush1.msra.mxu0 %v327
    %1214 = vmatprep.subr.mxu0 %v325
    %1215 = vmatpush1.msra.mxu0 %v324
    %1216 = vmatprep.subr.mxu0 %v322
    %1217 = vmatpush1.msra.mxu0 %v321
    %1218 = vmatprep.subr.mxu0 %v319
    %1219 = vmatpush1.msra.mxu0 %v318
    %1220 = vmatprep.subr.mxu0 0.0
    %1221 = vmatpush2.msra.mxu0 0.0
    %1222 = vmatprep.subr.mxu0 0.0
    %1223 = vmatpush2.msra.mxu0 0.0
    %1224 = vmatprep.subr.mxu0 0.0
    %1225 = vmatpush2.msra.mxu0 0.0
    %1226 = vmatprep.subr.mxu0 0.0
    %1227 = vmatpush2.msra.mxu0 0.0
    %1228 = vmatprep.subr.mxu0 0.0
    %1229 = vmatpush2.msra.mxu0 0.0
    %1230 = vmatprep.subr.mxu0 0.0
    %1231 = vmatpush2.msra.mxu0 0.0
    %1232 = vmatprep.subr.mxu0 0.0
    %1233 = vmatpush2.msra.mxu0 0.0
    %1234 = vmatprep.subr.mxu0 0.0
    %1235 = vmatpush2.msra.mxu0 0.0
    %1236 = vmatprep.subr.mxu0 0.0
    %1237 = vmatpush2.msra.mxu0 0.0
    %1238 = vmatprep.subr.mxu0 0.0
    %1239 = vmatpush2.msra.mxu0 0.0
    %1240 = vmatprep.subr.mxu0 0.0
    %1241 = vmatpush2.msra.mxu0 0.0
    %1242 = vmatprep.subr.mxu0 0.0
    %1243 = vmatpush2.msra.mxu0 0.0
    %1244 = vmatprep.subr.mxu0 0.0
    %1245 = vmatpush2.msra.mxu0 0.0
    %1246 = vmatprep.subr.mxu0 0.0
    %1247 = vmatpush2.msra.mxu0 0.0
    %1248 = vmatprep.subr.mxu0 0.0
    %1249 = vmatpush2.msra.mxu0 0.0
    %1250 = vmatprep.subr.mxu0 0.0
    %1251 = vmatpush2.msra.mxu0 0.0
    %1252 = vmatprep.mubr.f32.mxu0 0.0
    %1253 = vmatmul.mubr.f32.gmra.mxu0 %v1186
    %v1254 = vpop.f32.mrf.mxu0
    %v1255 = vadd.f32 0.0, %v1254
    %v1256 = vpop.f32.mrf.mxu0
    %v1257 = vadd.f32 0.0, %v1256
    %1258 = vdwg.mxu0
    %1259 = vmatprep.subr.mxu0 0.0
    %1260 = vmatpush1.msra.mxu0 %v365
    %1261 = vmatprep.subr.mxu0 0.0
    %1262 = vmatpush1.msra.mxu0 %v362
    %1263 = vmatprep.subr.mxu0 0.0
    %1264 = vmatpush1.msra.mxu0 %v359
    %1265 = vmatprep.subr.mxu0 0.0
    %1266 = vmatpush1.msra.mxu0 %v356
    %1267 = vmatprep.subr.mxu0 0.0
    %1268 = vmatpush1.msra.mxu0 %v353
    %1269 = vmatprep.subr.mxu0 0.0
    %1270 = vmatpush1.msra.mxu0 %v350
    %1271 = vmatprep.subr.mxu0 0.0
    %1272 = vmatpush1.msra.mxu0 %v347
    %1273 = vmatprep.subr.mxu0 0.0
    %1274 = vmatpush1.msra.mxu0 %v344
    %1275 = vmatprep.subr.mxu0 0.0
    %1276 = vmatpush1.msra.mxu0 %v341
    %1277 = vmatprep.subr.mxu0 0.0
    %1278 = vmatpush1.msra.mxu0 %v338
    %1279 = vmatprep.subr.mxu0 0.0
    %1280 = vmatpush1.msra.mxu0 %v335
    %1281 = vmatprep.subr.mxu0 0.0
    %1282 = vmatpush1.msra.mxu0 %v332
    %1283 = vmatprep.subr.mxu0 0.0
    %1284 = vmatpush1.msra.mxu0 %v329
    %1285 = vmatprep.subr.mxu0 0.0
    %1286 = vmatpush1.msra.mxu0 %v326
    %1287 = vmatprep.subr.mxu0 0.0
    %1288 = vmatpush1.msra.mxu0 %v323
    %1289 = vmatprep.subr.mxu0 0.0
    %1290 = vmatpush1.msra.mxu0 %v320
    %1291 = vmatprep.subr.mxu0 0.0
    %1292 = vmatpush2.msra.mxu0 0.0
    %1293 = vmatprep.subr.mxu0 0.0
    %1294 = vmatpush2.msra.mxu0 0.0
    %1295 = vmatprep.subr.mxu0 0.0
    %1296 = vmatpush2.msra.mxu0 0.0
    %1297 = vmatprep.subr.mxu0 0.0
    %1298 = vmatpush2.msra.mxu0 0.0
    %1299 = vmatprep.subr.mxu0 0.0
    %1300 = vmatpush2.msra.mxu0 0.0
    %1301 = vmatprep.subr.mxu0 0.0
    %1302 = vmatpush2.msra.mxu0 0.0
    %1303 = vmatprep.subr.mxu0 0.0
    %1304 = vmatpush2.msra.mxu0 0.0
    %1305 = vmatprep.subr.mxu0 0.0
    %1306 = vmatpush2.msra.mxu0 0.0
    %1307 = vmatprep.subr.mxu0 0.0
    %1308 = vmatpush2.msra.mxu0 0.0
    %1309 = vmatprep.subr.mxu0 0.0
    %1310 = vmatpush2.msra.mxu0 0.0
    %1311 = vmatprep.subr.mxu0 0.0
    %1312 = vmatpush2.msra.mxu0 0.0
    %1313 = vmatprep.subr.mxu0 0.0
    %1314 = vmatpush2.msra.mxu0 0.0
    %1315 = vmatprep.subr.mxu0 0.0
    %1316 = vmatpush2.msra.mxu0 0.0
    %1317 = vmatprep.subr.mxu0 0.0
    %1318 = vmatpush2.msra.mxu0 0.0
    %1319 = vmatprep.subr.mxu0 0.0
    %1320 = vmatpush2.msra.mxu0 0.0
    %1321 = vmatprep.subr.mxu0 0.0
    %1322 = vmatpush2.msra.mxu0 0.0
    %1323 = vmatprep.mubr.f32.mxu0 0.0
    %1324 = vmatmul.mubr.f32.gmra.mxu0 %v1186
    %v1325 = vpop.f32.mrf.mxu0
    %v1326 = vadd.f32 0.0, %v1325
    %v1327 = vpop.f32.mrf.mxu0
    %1328 = vdwg.mxu0
    %v1329 = vadd.f32 %v196, %v1255
    %v1330 = vxor.u32 %v1329, 2147483648
    %v1331 = vmul.f32 %v1330, 1.442695
    %v1332 = vpow.pop %v1331
    %v1333 = vadd.f32 %v1332, 1.0
    %v1334 = vrcp.pop %v1333
    %v1335 = vmul.f32 1.0, %v1334
    %v1336 = vadd.f32 %v1257, %v371
    %v1337 = vmul.f32 %v1335, %v1336
    %v1338 = vadd.f32 %v198, %v1337
    %v1339 = vtanh.pop %v1338
    %v1340 = vadd.f32 %v304, %v1326
    %v1341 = vxor.u32 %v1340, 2147483648
    %v1342 = vmul.f32 %v1341, 1.442695
    %v1343 = vpow.pop %v1342
    %v1344 = vadd.f32 %v1343, 1.0
    %v1345 = vrcp.pop %v1344
    %v1346 = vmul.f32 1.0, %v1345
    %v1347 = vsub.f32 %v1186, %v1339
    %v1348 = vmul.f32 %v1346, %v1347
    %v1349 = vadd.f32 %v1339, %v1348
    %1350 = vst [vmem:[%s6 + $0x28] sm:$0xff] %v1349
    %1351 = vmatprep.subr.mxu0 %v364
    %1352 = vmatpush1.msra.mxu0 %v363
    %1353 = vmatprep.subr.mxu0 %v361
    %1354 = vmatpush1.msra.mxu0 %v360
    %1355 = vmatprep.subr.mxu0 %v358
    %1356 = vmatpush1.msra.mxu0 %v357
    %1357 = vmatprep.subr.mxu0 %v355
    %1358 = vmatpush1.msra.mxu0 %v354
    %1359 = vmatprep.subr.mxu0 %v352
    %1360 = vmatpush1.msra.mxu0 %v351
    %1361 = vmatprep.subr.mxu0 %v349
    %1362 = vmatpush1.msra.mxu0 %v348
    %1363 = vmatprep.subr.mxu0 %v346
    %1364 = vmatpush1.msra.mxu0 %v345
    %1365 = vmatprep.subr.mxu0 %v343
    %1366 = vmatpush1.msra.mxu0 %v342
    %1367 = vmatprep.subr.mxu0 %v340
    %1368 = vmatpush1.msra.mxu0 %v339
    %1369 = vmatprep.subr.mxu0 %v337
    %1370 = vmatpush1.msra.mxu0 %v336
    %1371 = vmatprep.subr.mxu0 %v334
    %1372 = vmatpush1.msra.mxu0 %v333
    %1373 = vmatprep.subr.mxu0 %v331
    %1374 = vmatpush1.msra.mxu0 %v330
    %1375 = vmatprep.subr.mxu0 %v328
    %1376 = vmatpush1.msra.mxu0 %v327
    %1377 = vmatprep.subr.mxu0 %v325
    %1378 = vmatpush1.msra.mxu0 %v324
    %1379 = vmatprep.subr.mxu0 %v322
    %1380 = vmatpush1.msra.mxu0 %v321
    %1381 = vmatprep.subr.mxu0 %v319
    %1382 = vmatpush1.msra.mxu0 %v318
    %1383 = vmatprep.subr.mxu0 0.0
    %1384 = vmatpush2.msra.mxu0 0.0
    %1385 = vmatprep.subr.mxu0 0.0
    %1386 = vmatpush2.msra.mxu0 0.0
    %1387 = vmatprep.subr.mxu0 0.0
    %1388 = vmatpush2.msra.mxu0 0.0
    %1389 = vmatprep.subr.mxu0 0.0
    %1390 = vmatpush2.msra.mxu0 0.0
    %1391 = vmatprep.subr.mxu0 0.0
    %1392 = vmatpush2.msra.mxu0 0.0
    %1393 = vmatprep.subr.mxu0 0.0
    %1394 = vmatpush2.msra.mxu0 0.0
    %1395 = vmatprep.subr.mxu0 0.0
    %1396 = vmatpush2.msra.mxu0 0.0
    %1397 = vmatprep.subr.mxu0 0.0
    %1398 = vmatpush2.msra.mxu0 0.0
    %1399 = vmatprep.subr.mxu0 0.0
    %1400 = vmatpush2.msra.mxu0 0.0
    %1401 = vmatprep.subr.mxu0 0.0
    %1402 = vmatpush2.msra.mxu0 0.0
    %1403 = vmatprep.subr.mxu0 0.0
    %1404 = vmatpush2.msra.mxu0 0.0
    %1405 = vmatprep.subr.mxu0 0.0
    %1406 = vmatpush2.msra.mxu0 0.0
    %1407 = vmatprep.subr.mxu0 0.0
    %1408 = vmatpush2.msra.mxu0 0.0
    %1409 = vmatprep.subr.mxu0 0.0
    %1410 = vmatpush2.msra.mxu0 0.0
    %1411 = vmatprep.subr.mxu0 0.0
    %1412 = vmatpush2.msra.mxu0 0.0
    %1413 = vmatprep.subr.mxu0 0.0
    %1414 = vmatpush2.msra.mxu0 0.0
    %1415 = vmatprep.mubr.f32.mxu0 0.0
    %1416 = vmatmul.mubr.f32.gmra.mxu0 %v1349
    %v1417 = vpop.f32.mrf.mxu0
    %v1418 = vadd.f32 0.0, %v1417
    %v1419 = vpop.f32.mrf.mxu0
    %v1420 = vadd.f32 0.0, %v1419
    %1421 = vdwg.mxu0
    %1422 = vmatprep.subr.mxu0 0.0
    %1423 = vmatpush1.msra.mxu0 %v365
    %1424 = vmatprep.subr.mxu0 0.0
    %1425 = vmatpush1.msra.mxu0 %v362
    %1426 = vmatprep.subr.mxu0 0.0
    %1427 = vmatpush1.msra.mxu0 %v359
    %1428 = vmatprep.subr.mxu0 0.0
    %1429 = vmatpush1.msra.mxu0 %v356
    %1430 = vmatprep.subr.mxu0 0.0
    %1431 = vmatpush1.msra.mxu0 %v353
    %1432 = vmatprep.subr.mxu0 0.0
    %1433 = vmatpush1.msra.mxu0 %v350
    %1434 = vmatprep.subr.mxu0 0.0
    %1435 = vmatpush1.msra.mxu0 %v347
    %1436 = vmatprep.subr.mxu0 0.0
    %1437 = vmatpush1.msra.mxu0 %v344
    %1438 = vmatprep.subr.mxu0 0.0
    %1439 = vmatpush1.msra.mxu0 %v341
    %1440 = vmatprep.subr.mxu0 0.0
    %1441 = vmatpush1.msra.mxu0 %v338
    %1442 = vmatprep.subr.mxu0 0.0
    %1443 = vmatpush1.msra.mxu0 %v335
    %1444 = vmatprep.subr.mxu0 0.0
    %1445 = vmatpush1.msra.mxu0 %v332
    %1446 = vmatprep.subr.mxu0 0.0
    %1447 = vmatpush1.msra.mxu0 %v329
    %1448 = vmatprep.subr.mxu0 0.0
    %1449 = vmatpush1.msra.mxu0 %v326
    %1450 = vmatprep.subr.mxu0 0.0
    %1451 = vmatpush1.msra.mxu0 %v323
    %1452 = vmatprep.subr.mxu0 0.0
    %1453 = vmatpush1.msra.mxu0 %v320
    %1454 = vmatprep.subr.mxu0 0.0
    %1455 = vmatpush2.msra.mxu0 0.0
    %1456 = vmatprep.subr.mxu0 0.0
    %1457 = vmatpush2.msra.mxu0 0.0
    %1458 = vmatprep.subr.mxu0 0.0
    %1459 = vmatpush2.msra.mxu0 0.0
    %1460 = vmatprep.subr.mxu0 0.0
    %1461 = vmatpush2.msra.mxu0 0.0
    %1462 = vmatprep.subr.mxu0 0.0
    %1463 = vmatpush2.msra.mxu0 0.0
    %1464 = vmatprep.subr.mxu0 0.0
    %1465 = vmatpush2.msra.mxu0 0.0
    %1466 = vmatprep.subr.mxu0 0.0
    %1467 = vmatpush2.msra.mxu0 0.0
    %1468 = vmatprep.subr.mxu0 0.0
    %1469 = vmatpush2.msra.mxu0 0.0
    %1470 = vmatprep.subr.mxu0 0.0
    %1471 = vmatpush2.msra.mxu0 0.0
    %1472 = vmatprep.subr.mxu0 0.0
    %1473 = vmatpush2.msra.mxu0 0.0
    %1474 = vmatprep.subr.mxu0 0.0
    %1475 = vmatpush2.msra.mxu0 0.0
    %1476 = vmatprep.subr.mxu0 0.0
    %1477 = vmatpush2.msra.mxu0 0.0
    %1478 = vmatprep.subr.mxu0 0.0
    %1479 = vmatpush2.msra.mxu0 0.0
    %1480 = vmatprep.subr.mxu0 0.0
    %1481 = vmatpush2.msra.mxu0 0.0
    %1482 = vmatprep.subr.mxu0 0.0
    %1483 = vmatpush2.msra.mxu0 0.0
    %1484 = vmatprep.subr.mxu0 0.0
    %1485 = vmatpush2.msra.mxu0 0.0
    %1486 = vmatprep.mubr.f32.mxu0 0.0
    %1487 = vmatmul.mubr.f32.gmra.mxu0 %v1349
    %v1488 = vpop.f32.mrf.mxu0
    %v1489 = vadd.f32 0.0, %v1488
    %v1490 = vpop.f32.mrf.mxu0
    %1491 = vdwg.mxu0
    %v1492 = vadd.f32 %v202, %v1418
    %v1493 = vxor.u32 %v1492, 2147483648
    %v1494 = vmul.f32 %v1493, 1.442695
    %v1495 = vpow.pop %v1494
    %v1496 = vadd.f32 %v1495, 1.0
    %v1497 = vrcp.pop %v1496
    %v1498 = vmul.f32 1.0, %v1497
    %v1499 = vadd.f32 %v1420, %v371
    %v1500 = vmul.f32 %v1498, %v1499
    %v1501 = vadd.f32 %v204, %v1500
    %v1502 = vtanh.pop %v1501
    %v1503 = vadd.f32 %v309, %v1489
    %v1504 = vxor.u32 %v1503, 2147483648
    %v1505 = vmul.f32 %v1504, 1.442695
    %v1506 = vpow.pop %v1505
    %v1507 = vadd.f32 %v1506, 1.0
    %v1508 = vrcp.pop %v1507
    %v1509 = vmul.f32 1.0, %v1508
    %v1510 = vsub.f32 %v1349, %v1502
    %v1511 = vmul.f32 %v1509, %v1510
    %v1512 = vadd.f32 %v1502, %v1511
    %1513 = vst [vmem:[%s6 + $0x30] sm:$0xff] %v1512
    %1514 = vmatprep.subr.mxu0 %v364
    %1515 = vmatpush1.msra.mxu0 %v363
    %1516 = vmatprep.subr.mxu0 %v361
    %1517 = vmatpush1.msra.mxu0 %v360
    %1518 = vmatprep.subr.mxu0 %v358
    %1519 = vmatpush1.msra.mxu0 %v357
    %1520 = vmatprep.subr.mxu0 %v355
    %1521 = vmatpush1.msra.mxu0 %v354
    %1522 = vmatprep.subr.mxu0 %v352
    %1523 = vmatpush1.msra.mxu0 %v351
    %1524 = vmatprep.subr.mxu0 %v349
    %1525 = vmatpush1.msra.mxu0 %v348
    %1526 = vmatprep.subr.mxu0 %v346
    %1527 = vmatpush1.msra.mxu0 %v345
    %1528 = vmatprep.subr.mxu0 %v343
    %1529 = vmatpush1.msra.mxu0 %v342
    %1530 = vmatprep.subr.mxu0 %v340
    %1531 = vmatpush1.msra.mxu0 %v339
    %1532 = vmatprep.subr.mxu0 %v337
    %1533 = vmatpush1.msra.mxu0 %v336
    %1534 = vmatprep.subr.mxu0 %v334
    %1535 = vmatpush1.msra.mxu0 %v333
    %1536 = vmatprep.subr.mxu0 %v331
    %1537 = vmatpush1.msra.mxu0 %v330
    %1538 = vmatprep.subr.mxu0 %v328
    %1539 = vmatpush1.msra.mxu0 %v327
    %1540 = vmatprep.subr.mxu0 %v325
    %1541 = vmatpush1.msra.mxu0 %v324
    %1542 = vmatprep.subr.mxu0 %v322
    %1543 = vmatpush1.msra.mxu0 %v321
    %1544 = vmatprep.subr.mxu0 %v319
    %1545 = vmatpush1.msra.mxu0 %v318
    %1546 = vmatprep.subr.mxu0 0.0
    %1547 = vmatpush2.msra.mxu0 0.0
    %1548 = vmatprep.subr.mxu0 0.0
    %1549 = vmatpush2.msra.mxu0 0.0
    %1550 = vmatprep.subr.mxu0 0.0
    %1551 = vmatpush2.msra.mxu0 0.0
    %1552 = vmatprep.subr.mxu0 0.0
    %1553 = vmatpush2.msra.mxu0 0.0
    %1554 = vmatprep.subr.mxu0 0.0
    %1555 = vmatpush2.msra.mxu0 0.0
    %1556 = vmatprep.subr.mxu0 0.0
    %1557 = vmatpush2.msra.mxu0 0.0
    %1558 = vmatprep.subr.mxu0 0.0
    %1559 = vmatpush2.msra.mxu0 0.0
    %1560 = vmatprep.subr.mxu0 0.0
    %1561 = vmatpush2.msra.mxu0 0.0
    %1562 = vmatprep.subr.mxu0 0.0
    %1563 = vmatpush2.msra.mxu0 0.0
    %1564 = vmatprep.subr.mxu0 0.0
    %1565 = vmatpush2.msra.mxu0 0.0
    %1566 = vmatprep.subr.mxu0 0.0
    %1567 = vmatpush2.msra.mxu0 0.0
    %1568 = vmatprep.subr.mxu0 0.0
    %1569 = vmatpush2.msra.mxu0 0.0
    %1570 = vmatprep.subr.mxu0 0.0
    %1571 = vmatpush2.msra.mxu0 0.0
    %1572 = vmatprep.subr.mxu0 0.0
    %1573 = vmatpush2.msra.mxu0 0.0
    %1574 = vmatprep.subr.mxu0 0.0
    %1575 = vmatpush2.msra.mxu0 0.0
    %1576 = vmatprep.subr.mxu0 0.0
    %1577 = vmatpush2.msra.mxu0 0.0
    %1578 = vmatprep.mubr.f32.mxu0 0.0
    %1579 = vmatmul.mubr.f32.gmra.mxu0 %v1512
    %v1580 = vpop.f32.mrf.mxu0
    %v1581 = vadd.f32 0.0, %v1580
    %v1582 = vpop.f32.mrf.mxu0
    %v1583 = vadd.f32 0.0, %v1582
    %1584 = vdwg.mxu0
    %1585 = vmatprep.subr.mxu0 0.0
    %1586 = vmatpush1.msra.mxu0 %v365
    %1587 = vmatprep.subr.mxu0 0.0
    %1588 = vmatpush1.msra.mxu0 %v362
    %1589 = vmatprep.subr.mxu0 0.0
    %1590 = vmatpush1.msra.mxu0 %v359
    %1591 = vmatprep.subr.mxu0 0.0
    %1592 = vmatpush1.msra.mxu0 %v356
    %1593 = vmatprep.subr.mxu0 0.0
    %1594 = vmatpush1.msra.mxu0 %v353
    %1595 = vmatprep.subr.mxu0 0.0
    %1596 = vmatpush1.msra.mxu0 %v350
    %1597 = vmatprep.subr.mxu0 0.0
    %1598 = vmatpush1.msra.mxu0 %v347
    %1599 = vmatprep.subr.mxu0 0.0
    %1600 = vmatpush1.msra.mxu0 %v344
    %1601 = vmatprep.subr.mxu0 0.0
    %1602 = vmatpush1.msra.mxu0 %v341
    %1603 = vmatprep.subr.mxu0 0.0
    %1604 = vmatpush1.msra.mxu0 %v338
    %1605 = vmatprep.subr.mxu0 0.0
    %1606 = vmatpush1.msra.mxu0 %v335
    %1607 = vmatprep.subr.mxu0 0.0
    %1608 = vmatpush1.msra.mxu0 %v332
    %1609 = vmatprep.subr.mxu0 0.0
    %1610 = vmatpush1.msra.mxu0 %v329
    %1611 = vmatprep.subr.mxu0 0.0
    %1612 = vmatpush1.msra.mxu0 %v326
    %1613 = vmatprep.subr.mxu0 0.0
    %1614 = vmatpush1.msra.mxu0 %v323
    %1615 = vmatprep.subr.mxu0 0.0
    %1616 = vmatpush1.msra.mxu0 %v320
    %1617 = vmatprep.subr.mxu0 0.0
    %1618 = vmatpush2.msra.mxu0 0.0
    %1619 = vmatprep.subr.mxu0 0.0
    %1620 = vmatpush2.msra.mxu0 0.0
    %1621 = vmatprep.subr.mxu0 0.0
    %1622 = vmatpush2.msra.mxu0 0.0
    %1623 = vmatprep.subr.mxu0 0.0
    %1624 = vmatpush2.msra.mxu0 0.0
    %1625 = vmatprep.subr.mxu0 0.0
    %1626 = vmatpush2.msra.mxu0 0.0
    %1627 = vmatprep.subr.mxu0 0.0
    %1628 = vmatpush2.msra.mxu0 0.0
    %1629 = vmatprep.subr.mxu0 0.0
    %1630 = vmatpush2.msra.mxu0 0.0
    %1631 = vmatprep.subr.mxu0 0.0
    %1632 = vmatpush2.msra.mxu0 0.0
    %1633 = vmatprep.subr.mxu0 0.0
    %1634 = vmatpush2.msra.mxu0 0.0
    %1635 = vmatprep.subr.mxu0 0.0
    %1636 = vmatpush2.msra.mxu0 0.0
    %1637 = vmatprep.subr.mxu0 0.0
    %1638 = vmatpush2.msra.mxu0 0.0
    %1639 = vmatprep.subr.mxu0 0.0
    %1640 = vmatpush2.msra.mxu0 0.0
    %1641 = vmatprep.subr.mxu0 0.0
    %1642 = vmatpush2.msra.mxu0 0.0
    %1643 = vmatprep.subr.mxu0 0.0
    %1644 = vmatpush2.msra.mxu0 0.0
    %1645 = vmatprep.subr.mxu0 0.0
    %1646 = vmatpush2.msra.mxu0 0.0
    %1647 = vmatprep.subr.mxu0 0.0
    %1648 = vmatpush2.msra.mxu0 0.0
    %1649 = vmatprep.mubr.f32.mxu0 0.0
    %1650 = vmatmul.mubr.f32.gmra.mxu0 %v1512
    %v1651 = vpop.f32.mrf.mxu0
    %v1652 = vadd.f32 0.0, %v1651
    %v1653 = vpop.f32.mrf.mxu0
    %1654 = vdwg.mxu0
    %v1655 = vadd.f32 %v208, %v1581
    %v1656 = vxor.u32 %v1655, 2147483648
    %v1657 = vmul.f32 %v1656, 1.442695
    %v1658 = vpow.pop %v1657
    %v1659 = vadd.f32 %v1658, 1.0
    %v1660 = vrcp.pop %v1659
    %v1661 = vmul.f32 1.0, %v1660
    %v1662 = vadd.f32 %v1583, %v371
    %v1663 = vmul.f32 %v1661, %v1662
    %v1664 = vadd.f32 %v210, %v1663
    %v1665 = vtanh.pop %v1664
    %v1666 = vadd.f32 %v314, %v1652
    %v1667 = vxor.u32 %v1666, 2147483648
    %v1668 = vmul.f32 %v1667, 1.442695
    %v1669 = vpow.pop %v1668
    %v1670 = vadd.f32 %v1669, 1.0
    %v1671 = vrcp.pop %v1670
    %v1672 = vmul.f32 1.0, %v1671
    %v1673 = vsub.f32 %v1512, %v1665
    %v1674 = vmul.f32 %v1672, %v1673
    %v1675 = vadd.f32 %v1665, %v1674
    %1676 = vst [vmem:[%s6 + $0x38] sm:$0xff] %v1675
    // Predicated region
    $region30: #{forward.1} parent=1 // pred_check
      _
    $region31: #{forward.1} parent=1 // pred_check_branch
      %1678 = sbr.rel (0) target = $region33
    $region32: #{forward.1} parent=1 // pred_region
      _
    $region33: #{forward.1} parent=1 // pred_fallthru
      _
    // Predicated region
    $region34: #{forward.1} parent=1 // pred_check
      _
    $region35: #{forward.1} parent=1 // pred_check_branch
      %1680 = sbr.rel (0) target = $region37
    $region36: #{forward.1} parent=1 // pred_region
      _
    $region37: #{forward.1} parent=1 // pred_fallthru
      _
    %1681 = vsyncpa [#allocation3], 1

</llo_original>
